<compile_context>
chip_gen: v7x
topology: tpu7x:2x2x1
jax: 0.10.0
libtpu: 0.0.40
codegen_flags: <defaults>
</compile_context>

<pallas_src>
import functools

import jax
import jax.numpy as jnp
from jax.experimental import pallas as pl
from jax.experimental.pallas import tpu as pltpu

EPS = 1e-5


# ---------------------------------------------------------------------------
# Fused kernel: one (batch, output-row-block) step
# ---------------------------------------------------------------------------
def _fused_invres_kernel(x_ref, w1_ref, b1_ref, wdw_ref, bdw_ref, w3_ref, b3_ref,
                         o_ref, e_ref, *, W, stride, tr_out, use_res, zero_bottom):
    """Fused 1x1 expand -> 3x3 depthwise(stride) -> 1x1 project (+residual).

    x_ref  : (Hp, Wp, Cin)    zero-padded NHWC image (one batch element),
                              resident in VMEM across all row blocks of it.
    w1_ref : (Cin, chid)      folded 1x1 expand weights
    b1_ref : (1, chid)        folded BN bias (f32)
    wdw_ref: (9, chid)        folded 3x3 depthwise weights (f32)
    bdw_ref: (1, chid)        folded BN bias (f32)
    w3_ref : (chid, oup)      folded 1x1 project weights
    b3_ref : (1, oup)         folded BN bias (f32)
    o_ref  : (tr_out, W, oup) output row block (columns at stride-1 resolution;
                              column decimation for stride==2 is in the wrapper)
    e_ref  : (tre, Wp, chid)  f32 VMEM scratch for the expanded intermediate
                              of this row block (never written to HBM).
    """
    Wp = x_ref.shape[1]
    Cin = x_ref.shape[2]
    chid = w1_ref.shape[1]
    oup = w3_ref.shape[1]
    tre = e_ref.shape[0]                      # rows of expanded slab (+halo)

    rb = pl.program_id(1)
    r0 = pl.multiple_of(rb * (tr_out * stride), tr_out * stride)

    # Rows of the padded input needed for this output row block (1-row halo).
    x_slab = x_ref[pl.ds(r0, tre), :, :]                       # (tre, Wp, Cin)

    # ---- stage 1: 1x1 expand conv + BN + ReLU (f32 accumulation) ----------
    if Cin <= 16:
        # Tiny Cin: rank-Cin broadcast-FMA on the VPU (an MXU matmul with
        # K=Cin would use <4% of the systolic array) and no cross-sublane
        # reshape is needed.
        e = jnp.zeros((tre, Wp, chid), jnp.float32)
        for c in range(Cin):
            e = e + (x_slab[:, :, c:c + 1].astype(jnp.float32)
                     * w1_ref[c:c + 1, :].astype(jnp.float32))
    else:
        # Realistic channel counts: MXU matmul.
        xm = x_slab.reshape(tre * Wp, Cin)
        e = jnp.dot(xm, w1_ref[...], preferred_element_type=jnp.float32)
        e = e.reshape(tre, Wp, chid)
    e = jnp.maximum(e + b1_ref[...], 0.0)
    e_ref[...] = e

    # The depthwise conv expects the *expanded* map to be exactly zero at the
    # spatial padding positions (expanding a zero pad pixel gives relu(b1)!=0):
    # zero the halo columns always, and the halo rows when this block touches
    # the top/bottom border of the image.
    zero_col = jnp.zeros((tre, 1, chid), jnp.float32)
    e_ref[:, 0:1, :] = zero_col
    e_ref[:, Wp - 1:Wp, :] = zero_col

    @pl.when(rb == 0)
    def _zero_top():
        e_ref[0:1, :, :] = jnp.zeros((1, Wp, chid), jnp.float32)

    if zero_bottom:
        @pl.when(rb == pl.num_programs(1) - 1)
        def _zero_bot():
            e_ref[tre - 1:tre, :, :] = jnp.zeros((1, Wp, chid), jnp.float32)

    # ---- stage 2: 3x3 depthwise conv + BN + ReLU ---------------------------
    # For stride==2 only the needed output ROWS are assembled (row decimation
    # in-kernel); columns stay at stride-1 resolution (cheap, oup-channel
    # result is decimated by the caller).
    if stride == 1:
        row_slabs = [e_ref[dy:dy + tr_out, :, :] for dy in range(3)]
    else:
        row_slabs = [
            jnp.concatenate(
                [e_ref[dy + stride * j, :, :][None, :, :] for j in range(tr_out)],
                axis=0)
            for dy in range(3)]

    acc = jnp.zeros((tr_out, W, chid), jnp.float32)
    for dy in range(3):
        for dx in range(3):
            # TODO(synk): use pltpu.roll for the dx shift (XLU slot) instead of
            # the sublane-offset value slice if the VALU/load slots bind.
            w_tap = wdw_ref[dy * 3 + dx:dy * 3 + dx + 1, :]     # (1, chid)
            acc = acc + row_slabs[dy][:, dx:dx + W, :] * w_tap
    acc = jnp.maximum(acc + bdw_ref[...], 0.0)

    # ---- stage 3: 1x1 project conv + BN (+ fused residual) ----------------
    am = acc.reshape(tr_out * W, chid).astype(w3_ref.dtype)
    y = jnp.dot(am, w3_ref[...], preferred_element_type=jnp.float32) + b3_ref[...]
    if use_res:
        # residual comes straight from the already-resident input block
        res = x_slab[1:1 + tr_out, 1:1 + W, :]                  # (tr_out, W, Cin)
        y = y + res.reshape(tr_out * W, Cin).astype(jnp.float32)
    o_ref[...] = y.reshape(tr_out, W, oup).astype(o_ref.dtype)


# ---------------------------------------------------------------------------
# Wrappers
# ---------------------------------------------------------------------------
def _pick_row_block(ho, target=8):
    """Largest divisor of `ho` that is <= target (keeps blocks VMEM-friendly)."""
    t = max(1, min(ho, target))
    while ho % t:
        t -= 1
    return t


def inverted_residual_forward_nhwc(x_nhwc, params, stride, inp, oup, expand_ratio,
                                   *, act_dtype=jnp.float32, row_block=8):
    """Fused MobileNetV2 InvertedResidual forward on an NHWC input."""
    assert stride in (1, 2)
    B, H, W, Cin = x_nhwc.shape
    assert Cin == inp
    chid = inp * expand_ratio
    Ho = (H - 1) // stride + 1
    use_res = (stride == 1) and (inp == oup)

    tr_out = _pick_row_block(Ho, row_block)
    n_rb = Ho // tr_out
    tre = (tr_out - 1) * stride + 3            # expanded rows needed per block
    Hp, Wp = H + 2, W + 2
    # does the last row block read the bottom padded row?
    zero_bottom = ((Ho - 1) * stride + 2 == H + 1)

    xp = jnp.pad(x_nhwc.astype(act_dtype), ((0, 0), (1, 1), (1, 1), (0, 0)))

    w1 = params["w1"].astype(act_dtype)                         # (Cin, chid)
    b1 = params["b1"].astype(jnp.float32).reshape(1, chid)
    wdw = params["wdw"].astype(jnp.float32).reshape(9, chid)
    bdw = params["bdw"].astype(jnp.float32).reshape(1, chid)
    w3 = params["w3"].astype(act_dtype)                         # (chid, oup)
    b3 = params["b3"].astype(jnp.float32).reshape(1, oup)

    kernel = functools.partial(
        _fused_invres_kernel, W=W, stride=stride, tr_out=tr_out,
        use_res=use_res, zero_bottom=zero_bottom)

    out = pl.pallas_call(
        kernel,
        out_shape=jax.ShapeDtypeStruct((B, Ho, W, oup), act_dtype),
        grid_spec=pltpu.PrefetchScalarGridSpec(
            num_scalar_prefetch=0,
            grid=(B, n_rb),
            in_specs=[
                # whole padded image of one batch element; index_map is constant
                # in the row-block axis so it is DMA'd once per image and stays
                # resident (it only has Cin channels -> small).
                pl.BlockSpec((None, Hp, Wp, Cin), lambda b, r: (b, 0, 0, 0)),
                pl.BlockSpec((Cin, chid), lambda b, r: (0, 0)),
                pl.BlockSpec((1, chid), lambda b, r: (0, 0)),
                pl.BlockSpec((9, chid), lambda b, r: (0, 0)),
                pl.BlockSpec((1, chid), lambda b, r: (0, 0)),
                pl.BlockSpec((chid, oup), lambda b, r: (0, 0)),
                pl.BlockSpec((1, oup), lambda b, r: (0, 0)),
            ],
            out_specs=pl.BlockSpec((None, tr_out, W, oup),
                                   lambda b, r: (b, r, 0, 0)),
            scratch_shapes=[pltpu.VMEM((tre, Wp, chid), jnp.float32)],
        ),
        compiler_params=pltpu.CompilerParams(
            dimension_semantics=("parallel", "arbitrary"),
            vmem_limit_bytes=32 * 1024 * 1024),
    )(xp, w1, b1, wdw, bdw, w3, b3)

    if stride == 2:
        # TODO(synk): decimate columns in-kernel too (strided sublane reads);
        # rows are already decimated in-kernel, this slice is on the small
        # oup-channel result only.
        out = out[:, :, ::stride, :]
    return out


def inverted_residual_forward(x_nchw, params, stride, inp, oup, expand_ratio,
                              *, act_dtype=jnp.float32, row_block=8):
    # NCHW at the PyTorch-facing boundary; NHWC internally (channels on lanes).
    # Carrying NHWC through the surrounding model would remove these transposes.
    y = inverted_residual_forward_nhwc(
        jnp.transpose(x_nchw, (0, 2, 3, 1)), params, stride, inp, oup,
        expand_ratio, act_dtype=act_dtype, row_block=row_block)
    return jnp.transpose(y, (0, 3, 1, 2)).astype(x_nchw.dtype)


# ---------------------------------------------------------------------------
# Parameters & BN folding
# ---------------------------------------------------------------------------
def make_raw_params(key, inp, oup, expand_ratio):
    chid = inp * expand_ratio
    ks = jax.random.split(key, 15)

    def bn_params(k0, k1, k2, k3, c):
        gamma = jax.random.uniform(k0, (c,), jnp.float32, 0.5, 1.5)
        beta = jax.random.normal(k1, (c,), jnp.float32) * 0.1
        mean = jax.random.normal(k2, (c,), jnp.float32) * 0.1
        var = jax.random.uniform(k3, (c,), jnp.float32, 0.5, 1.5)
        return gamma, beta, mean, var

    raw = {
        "w1": jax.random.normal(ks[0], (inp, chid), jnp.float32) * 0.2,
        "bn1": bn_params(ks[1], ks[2], ks[3], ks[4], chid),
        "wdw": jax.random.normal(ks[5], (3, 3, chid), jnp.float32) * 0.2,
        "bn2": bn_params(ks[6], ks[7], ks[8], ks[9], chid),
        "w3": jax.random.normal(ks[10], (chid, oup), jnp.float32) * 0.2,
        "bn3": bn_params(ks[11], ks[12], ks[13], ks[14], oup),
    }
    return raw


def fold_bn(raw):
    def fold(g, b, m, v):
        s = g / jnp.sqrt(v + EPS)
        return s, b - m * s

    s1, b1 = fold(*raw["bn1"])
    s2, b2 = fold(*raw["bn2"])
    s3, b3 = fold(*raw["bn3"])
    return {
        "w1": raw["w1"] * s1[None, :],
        "b1": b1,
        "wdw": raw["wdw"] * s2[None, None, :],
        "bdw": b2,
        "w3": raw["w3"] * s3[None, :],
        "b3": b3,
    }


# ---------------------------------------------------------------------------
# Pure-JAX reference (lax convs + explicit BN), for correctness check
# ---------------------------------------------------------------------------
def reference_forward(x_nchw, raw, stride, inp, oup, expand_ratio):
    chid = inp * expand_ratio
    x = x_nchw.astype(jnp.float32)
    prec = jax.lax.Precision.HIGHEST

    def bn(y, p):
        g, b, m, v = p
        sh = (1, -1, 1, 1)
        return (y - m.reshape(sh)) / jnp.sqrt(v.reshape(sh) + EPS) * g.reshape(sh) + b.reshape(sh)

    dn = ("NCHW", "OIHW", "NCHW")
    w1 = jnp.transpose(raw["w1"], (1, 0)).reshape(chid, inp, 1, 1)
    h = jax.lax.conv_general_dilated(x, w1, (1, 1), "VALID",
                                     dimension_numbers=dn, precision=prec)
    h = jnp.maximum(bn(h, raw["bn1"]), 0.0)
    wdw = jnp.transpose(raw["wdw"], (2, 0, 1)).reshape(chid, 1, 3, 3)
    h = jax.lax.conv_general_dilated(h, wdw, (stride, stride), ((1, 1), (1, 1)),
                                     dimension_numbers=dn,
                                     feature_group_count=chid, precision=prec)
    h = jnp.maximum(bn(h, raw["bn2"]), 0.0)
    w3 = jnp.transpose(raw["w3"], (1, 0)).reshape(oup, chid, 1, 1)
    h = jax.lax.conv_general_dilated(h, w3, (1, 1), "VALID",
                                     dimension_numbers=dn, precision=prec)
    h = bn(h, raw["bn3"])
    if stride == 1 and inp == oup:
        h = h + x
    return h


# ---------------------------------------------------------------------------
if __name__ == "__main__":
    key = jax.random.PRNGKey(0)
    k1, k2, k3, k4 = jax.random.split(key, 4)

    # --- case 1: stride=1, inp==oup -> residual path (tight f32 check) ------
    B, inp, oup, H, W = 2, 4, 4, 16, 16
    expand_ratio = 6
    x = jax.random.normal(k1, (B, inp, H, W), jnp.float32)
    raw = make_raw_params(k2, inp, oup, expand_ratio)
    params = fold_bn(raw)

    out = jax.block_until_ready(
        inverted_residual_forward(x, params, 1, inp, oup, expand_ratio))
    ref = jax.block_until_ready(
        reference_forward(x, raw, 1, inp, oup, expand_ratio))
    assert out.shape == ref.shape == (B, oup, H, W)
    err1 = float(jnp.max(jnp.abs(out - ref)))
    assert jnp.allclose(out, ref, atol=1e-4, rtol=1e-4), err1

    # --- case 2: stride=2, no residual (row-decimated depthwise in-kernel) --
    oup2 = 8
    x2 = jax.random.normal(k3, (B, inp, H, W), jnp.float32)
    raw2 = make_raw_params(k4, inp, oup2, expand_ratio)
    params2 = fold_bn(raw2)

    out2 = jax.block_until_ready(
        inverted_residual_forward(x2, params2, 2, inp, oup2, expand_ratio))
    ref2 = jax.block_until_ready(
        reference_forward(x2, raw2, 2, inp, oup2, expand_ratio))
    assert out2.shape == ref2.shape == (B, oup2, H // 2, W // 2)
    err2 = float(jnp.max(jnp.abs(out2 - ref2)))
    assert jnp.allclose(out2, ref2, atol=1e-4, rtol=1e-4), err2

    # --- case 3: bf16 activations/weights (halves HBM traffic), loose check -
    out_bf = jax.block_until_ready(
        inverted_residual_forward(x, params, 1, inp, oup, expand_ratio,
                                  act_dtype=jnp.bfloat16))
    diff = out_bf.astype(jnp.float32) - ref
    rel = float(jnp.linalg.norm(diff) / (jnp.linalg.norm(ref) + 1e-12))
    assert rel < 0.05, rel

    print("KERNEL_OK")
</pallas_src>

<mosaic_0001>
module attributes {stable_mosaic.version = 11 : i64} {
  func.func @_fused_invres_kernel(%arg0: i32, %arg1: i32, %arg2: memref<1x18x18x4xf32, #tpu.memory_space<vmem>>, %arg3: memref<4x24xf32, #tpu.memory_space<vmem>>, %arg4: memref<1x24xf32, #tpu.memory_space<vmem>>, %arg5: memref<9x24xf32, #tpu.memory_space<vmem>>, %arg6: memref<1x24xf32, #tpu.memory_space<vmem>>, %arg7: memref<24x4xf32, #tpu.memory_space<vmem>>, %arg8: memref<1x4xf32, #tpu.memory_space<vmem>>, %arg9: memref<1x8x16x4xf32, #tpu.memory_space<vmem>>, %arg10: memref<10x18x24xf32, #tpu.memory_space<vmem>>) attributes {dimension_semantics = [#tpu.dimension_semantics<parallel>, #tpu.dimension_semantics<arbitrary>], iteration_bounds = array<i64: 2, 2>, scalar_prefetch = 0 : i64, scratch_operands = 1 : i64, tpu.core_type = #tpu.core_type<tc>, window_params = [{transform_indices = @transform_0, window_bounds = array<i64: 1, 18, 18, 4>}, {pipeline_mode = #tpu.pipeline_mode<synchronous>, transform_indices = @transform_1, window_bounds = array<i64: 4, 24>}, {pipeline_mode = #tpu.pipeline_mode<synchronous>, transform_indices = @transform_2, window_bounds = array<i64: 1, 24>}, {pipeline_mode = #tpu.pipeline_mode<synchronous>, transform_indices = @transform_3, window_bounds = array<i64: 9, 24>}, {pipeline_mode = #tpu.pipeline_mode<synchronous>, transform_indices = @transform_4, window_bounds = array<i64: 1, 24>}, {pipeline_mode = #tpu.pipeline_mode<synchronous>, transform_indices = @transform_5, window_bounds = array<i64: 24, 4>}, {pipeline_mode = #tpu.pipeline_mode<synchronous>, transform_indices = @transform_6, window_bounds = array<i64: 1, 4>}, {transform_indices = @transform_7, window_bounds = array<i64: 1, 8, 16, 4>}]} {
    %c8_i32 = arith.constant 8 : i32
    %0 = arith.muli %arg1, %c8_i32 : i32
    %1 = tpu.assume_multiple %0, 8 : i32
    %c0 = arith.constant 0 : index
    %2 = arith.index_cast %1 : i32 to index
    %c0_0 = arith.constant 0 : index
    %c0_1 = arith.constant 0 : index
    %3 = vector.load %arg2[%c0, %2, %c0_0, %c0_1] : memref<1x18x18x4xf32, #tpu.memory_space<vmem>>, vector<1x10x18x4xf32>
    %4 = vector.shape_cast %3 : vector<1x10x18x4xf32> to vector<10x18x4xf32>
    %cst = arith.constant 0.000000e+00 : f32
    %5 = vector.broadcast %cst : f32 to vector<10x18x24xf32>
    %6 = vector.extract_strided_slice %4 {offsets = [0, 0, 0], sizes = [10, 18, 1], strides = [1, 1, 1]} : vector<10x18x4xf32> to vector<10x18x1xf32>
    %c0_2 = arith.constant 0 : index
    %c0_3 = arith.constant 0 : index
    %7 = vector.load %arg3[%c0_2, %c0_3] : memref<4x24xf32, #tpu.memory_space<vmem>>, vector<1x24xf32>
    %8 = vector.shape_cast %7 : vector<1x24xf32> to vector<1x1x24xf32>
    %9 = vector.broadcast %6 : vector<10x18x1xf32> to vector<10x18x24xf32>
    %10 = vector.broadcast %8 : vector<1x1x24xf32> to vector<10x18x24xf32>
    %11 = arith.mulf %9, %10 : vector<10x18x24xf32>
    %12 = arith.addf %5, %11 : vector<10x18x24xf32>
    %13 = vector.extract_strided_slice %4 {offsets = [0, 0, 1], sizes = [10, 18, 1], strides = [1, 1, 1]} : vector<10x18x4xf32> to vector<10x18x1xf32>
    %c1 = arith.constant 1 : index
    %c0_4 = arith.constant 0 : index
    %14 = vector.load %arg3[%c1, %c0_4] : memref<4x24xf32, #tpu.memory_space<vmem>>, vector<1x24xf32>
    %15 = vector.shape_cast %14 : vector<1x24xf32> to vector<1x1x24xf32>
    %16 = vector.broadcast %13 : vector<10x18x1xf32> to vector<10x18x24xf32>
    %17 = vector.broadcast %15 : vector<1x1x24xf32> to vector<10x18x24xf32>
    %18 = arith.mulf %16, %17 : vector<10x18x24xf32>
    %19 = arith.addf %12, %18 : vector<10x18x24xf32>
    %20 = vector.extract_strided_slice %4 {offsets = [0, 0, 2], sizes = [10, 18, 1], strides = [1, 1, 1]} : vector<10x18x4xf32> to vector<10x18x1xf32>
    %c2 = arith.constant 2 : index
    %c0_5 = arith.constant 0 : index
    %21 = vector.load %arg3[%c2, %c0_5] : memref<4x24xf32, #tpu.memory_space<vmem>>, vector<1x24xf32>
    %22 = vector.shape_cast %21 : vector<1x24xf32> to vector<1x1x24xf32>
    %23 = vector.broadcast %20 : vector<10x18x1xf32> to vector<10x18x24xf32>
    %24 = vector.broadcast %22 : vector<1x1x24xf32> to vector<10x18x24xf32>
    %25 = arith.mulf %23, %24 : vector<10x18x24xf32>
    %26 = arith.addf %19, %25 : vector<10x18x24xf32>
    %27 = vector.extract_strided_slice %4 {offsets = [0, 0, 3], sizes = [10, 18, 1], strides = [1, 1, 1]} : vector<10x18x4xf32> to vector<10x18x1xf32>
    %c3 = arith.constant 3 : index
    %c0_6 = arith.constant 0 : index
    %28 = vector.load %arg3[%c3, %c0_6] : memref<4x24xf32, #tpu.memory_space<vmem>>, vector<1x24xf32>
    %29 = vector.shape_cast %28 : vector<1x24xf32> to vector<1x1x24xf32>
    %30 = vector.broadcast %27 : vector<10x18x1xf32> to vector<10x18x24xf32>
    %31 = vector.broadcast %29 : vector<1x1x24xf32> to vector<10x18x24xf32>
    %32 = arith.mulf %30, %31 : vector<10x18x24xf32>
    %33 = arith.addf %26, %32 : vector<10x18x24xf32>
    %c0_7 = arith.constant 0 : index
    %c0_8 = arith.constant 0 : index
    %34 = vector.load %arg4[%c0_7, %c0_8] : memref<1x24xf32, #tpu.memory_space<vmem>>, vector<1x24xf32>
    %35 = vector.shape_cast %34 : vector<1x24xf32> to vector<1x1x24xf32>
    %36 = vector.broadcast %35 : vector<1x1x24xf32> to vector<10x18x24xf32>
    %37 = arith.addf %33, %36 : vector<10x18x24xf32>
    %cst_9 = arith.constant 0.000000e+00 : f32
    %38 = vector.broadcast %cst_9 : f32 to vector<10x18x24xf32>
    %39 = arith.maximumf %37, %38 : vector<10x18x24xf32>
    %c0_10 = arith.constant 0 : index
    %c0_11 = arith.constant 0 : index
    %c0_12 = arith.constant 0 : index
    %40 = vector.load %arg10[%c0_10, %c0_11, %c0_12] : memref<10x18x24xf32, #tpu.memory_space<vmem>>, vector<10x18x24xf32>
    tpu.vector_store %arg10[%c0_10, %c0_11, %c0_12], %39 {strides = array<i32>} : memref<10x18x24xf32, #tpu.memory_space<vmem>>, vector<10x18x24xf32>,
    %cst_13 = arith.constant 0.000000e+00 : f32
    %41 = vector.broadcast %cst_13 : f32 to vector<10x1x24xf32>
    %c0_14 = arith.constant 0 : index
    %c0_15 = arith.constant 0 : index
    %c0_16 = arith.constant 0 : index
    %42 = vector.load %arg10[%c0_14, %c0_15, %c0_16] : memref<10x18x24xf32, #tpu.memory_space<vmem>>, vector<10x1x24xf32>
    tpu.vector_store %arg10[%c0_14, %c0_15, %c0_16], %41 {strides = array<i32>} : memref<10x18x24xf32, #tpu.memory_space<vmem>>, vector<10x1x24xf32>,
    %c0_17 = arith.constant 0 : index
    %c17 = arith.constant 17 : index
    %c0_18 = arith.constant 0 : index
    %43 = vector.load %arg10[%c0_17, %c17, %c0_18] : memref<10x18x24xf32, #tpu.memory_space<vmem>>, vector<10x1x24xf32>
    tpu.vector_store %arg10[%c0_17, %c17, %c0_18], %41 {strides = array<i32>} : memref<10x18x24xf32, #tpu.memory_space<vmem>>, vector<10x1x24xf32>,
    %c0_i32 = arith.constant 0 : i32
    %44 = arith.cmpi eq, %arg1, %c0_i32 : i32
    %45 = arith.extui %44 : i1 to i32
    %c0_i32_19 = arith.constant 0 : i32
    %46 = arith.cmpi ne, %45, %c0_i32_19 : i32
    scf.if %46 {
      %cst_56 = arith.constant 0.000000e+00 : f32
      %127 = vector.broadcast %cst_56 : f32 to vector<1x18x24xf32>
      %c0_57 = arith.constant 0 : index
      %c0_58 = arith.constant 0 : index
      %c0_59 = arith.constant 0 : index
      %128 = vector.load %arg10[%c0_57, %c0_58, %c0_59] : memref<10x18x24xf32, #tpu.memory_space<vmem>>, vector<1x18x24xf32>
      tpu.vector_store %arg10[%c0_57, %c0_58, %c0_59], %127 {strides = array<i32>} : memref<10x18x24xf32, #tpu.memory_space<vmem>>, vector<1x18x24xf32>,
    } else {
    }
    %c1_i32 = arith.constant 1 : i32
    %47 = arith.cmpi eq, %arg1, %c1_i32 : i32
    %48 = arith.extui %47 : i1 to i32
    %c0_i32_20 = arith.constant 0 : i32
    %49 = arith.cmpi ne, %48, %c0_i32_20 : i32
    scf.if %49 {
      %cst_56 = arith.constant 0.000000e+00 : f32
      %127 = vector.broadcast %cst_56 : f32 to vector<1x18x24xf32>
      %c9 = arith.constant 9 : index
      %c0_57 = arith.constant 0 : index
      %c0_58 = arith.constant 0 : index
      %128 = vector.load %arg10[%c9, %c0_57, %c0_58] : memref<10x18x24xf32, #tpu.memory_space<vmem>>, vector<1x18x24xf32>
      tpu.vector_store %arg10[%c9, %c0_57, %c0_58], %127 {strides = array<i32>} : memref<10x18x24xf32, #tpu.memory_space<vmem>>, vector<1x18x24xf32>,
    } else {
    }
    %c0_21 = arith.constant 0 : index
    %c0_22 = arith.constant 0 : index
    %c0_23 = arith.constant 0 : index
    %50 = vector.load %arg10[%c0_21, %c0_22, %c0_23] : memref<10x18x24xf32, #tpu.memory_space<vmem>>, vector<8x18x24xf32>
    %c1_24 = arith.constant 1 : index
    %c0_25 = arith.constant 0 : index
    %c0_26 = arith.constant 0 : index
    %51 = vector.load %arg10[%c1_24, %c0_25, %c0_26] : memref<10x18x24xf32, #tpu.memory_space<vmem>>, vector<8x18x24xf32>
    %c2_27 = arith.constant 2 : index
    %c0_28 = arith.constant 0 : index
    %c0_29 = arith.constant 0 : index
    %52 = vector.load %arg10[%c2_27, %c0_28, %c0_29] : memref<10x18x24xf32, #tpu.memory_space<vmem>>, vector<8x18x24xf32>
    %cst_30 = arith.constant 0.000000e+00 : f32
    %53 = vector.broadcast %cst_30 : f32 to vector<8x16x24xf32>
    %c0_31 = arith.constant 0 : index
    %c0_32 = arith.constant 0 : index
    %54 = vector.load %arg5[%c0_31, %c0_32] : memref<9x24xf32, #tpu.memory_space<vmem>>, vector<1x24xf32>
    %55 = vector.extract_strided_slice %50 {offsets = [0, 0, 0], sizes = [8, 16, 24], strides = [1, 1, 1]} : vector<8x18x24xf32> to vector<8x16x24xf32>
    %56 = vector.shape_cast %54 : vector<1x24xf32> to vector<1x1x24xf32>
    %57 = vector.broadcast %56 : vector<1x1x24xf32> to vector<8x16x24xf32>
    %58 = arith.mulf %55, %57 : vector<8x16x24xf32>
    %59 = arith.addf %53, %58 : vector<8x16x24xf32>
    %c1_33 = arith.constant 1 : index
    %c0_34 = arith.constant 0 : index
    %60 = vector.load %arg5[%c1_33, %c0_34] : memref<9x24xf32, #tpu.memory_space<vmem>>, vector<1x24xf32>
    %61 = vector.extract_strided_slice %50 {offsets = [0, 1, 0], sizes = [8, 16, 24], strides = [1, 1, 1]} : vector<8x18x24xf32> to vector<8x16x24xf32>
    %62 = vector.shape_cast %60 : vector<1x24xf32> to vector<1x1x24xf32>
    %63 = vector.broadcast %62 : vector<1x1x24xf32> to vector<8x16x24xf32>
    %64 = arith.mulf %61, %63 : vector<8x16x24xf32>
    %65 = arith.addf %59, %64 : vector<8x16x24xf32>
    %c2_35 = arith.constant 2 : index
    %c0_36 = arith.constant 0 : index
    %66 = vector.load %arg5[%c2_35, %c0_36] : memref<9x24xf32, #tpu.memory_space<vmem>>, vector<1x24xf32>
    %67 = vector.extract_strided_slice %50 {offsets = [0, 2, 0], sizes = [8, 16, 24], strides = [1, 1, 1]} : vector<8x18x24xf32> to vector<8x16x24xf32>
    %68 = vector.shape_cast %66 : vector<1x24xf32> to vector<1x1x24xf32>
    %69 = vector.broadcast %68 : vector<1x1x24xf32> to vector<8x16x24xf32>
    %70 = arith.mulf %67, %69 : vector<8x16x24xf32>
    %71 = arith.addf %65, %70 : vector<8x16x24xf32>
    %c3_37 = arith.constant 3 : index
    %c0_38 = arith.constant 0 : index
    %72 = vector.load %arg5[%c3_37, %c0_38] : memref<9x24xf32, #tpu.memory_space<vmem>>, vector<1x24xf32>
    %73 = vector.extract_strided_slice %51 {offsets = [0, 0, 0], sizes = [8, 16, 24], strides = [1, 1, 1]} : vector<8x18x24xf32> to vector<8x16x24xf32>
    %74 = vector.shape_cast %72 : vector<1x24xf32> to vector<1x1x24xf32>
    %75 = vector.broadcast %74 : vector<1x1x24xf32> to vector<8x16x24xf32>
    %76 = arith.mulf %73, %75 : vector<8x16x24xf32>
    %77 = arith.addf %71, %76 : vector<8x16x24xf32>
    %c4 = arith.constant 4 : index
    %c0_39 = arith.constant 0 : index
    %78 = vector.load %arg5[%c4, %c0_39] : memref<9x24xf32, #tpu.memory_space<vmem>>, vector<1x24xf32>
    %79 = vector.extract_strided_slice %51 {offsets = [0, 1, 0], sizes = [8, 16, 24], strides = [1, 1, 1]} : vector<8x18x24xf32> to vector<8x16x24xf32>
    %80 = vector.shape_cast %78 : vector<1x24xf32> to vector<1x1x24xf32>
    %81 = vector.broadcast %80 : vector<1x1x24xf32> to vector<8x16x24xf32>
    %82 = arith.mulf %79, %81 : vector<8x16x24xf32>
    %83 = arith.addf %77, %82 : vector<8x16x24xf32>
    %c5 = arith.constant 5 : index
    %c0_40 = arith.constant 0 : index
    %84 = vector.load %arg5[%c5, %c0_40] : memref<9x24xf32, #tpu.memory_space<vmem>>, vector<1x24xf32>
    %85 = vector.extract_strided_slice %51 {offsets = [0, 2, 0], sizes = [8, 16, 24], strides = [1, 1, 1]} : vector<8x18x24xf32> to vector<8x16x24xf32>
    %86 = vector.shape_cast %84 : vector<1x24xf32> to vector<1x1x24xf32>
    %87 = vector.broadcast %86 : vector<1x1x24xf32> to vector<8x16x24xf32>
    %88 = arith.mulf %85, %87 : vector<8x16x24xf32>
    %89 = arith.addf %83, %88 : vector<8x16x24xf32>
    %c6 = arith.constant 6 : index
    %c0_41 = arith.constant 0 : index
    %90 = vector.load %arg5[%c6, %c0_41] : memref<9x24xf32, #tpu.memory_space<vmem>>, vector<1x24xf32>
    %91 = vector.extract_strided_slice %52 {offsets = [0, 0, 0], sizes = [8, 16, 24], strides = [1, 1, 1]} : vector<8x18x24xf32> to vector<8x16x24xf32>
    %92 = vector.shape_cast %90 : vector<1x24xf32> to vector<1x1x24xf32>
    %93 = vector.broadcast %92 : vector<1x1x24xf32> to vector<8x16x24xf32>
    %94 = arith.mulf %91, %93 : vector<8x16x24xf32>
    %95 = arith.addf %89, %94 : vector<8x16x24xf32>
    %c7 = arith.constant 7 : index
    %c0_42 = arith.constant 0 : index
    %96 = vector.load %arg5[%c7, %c0_42] : memref<9x24xf32, #tpu.memory_space<vmem>>, vector<1x24xf32>
    %97 = vector.extract_strided_slice %52 {offsets = [0, 1, 0], sizes = [8, 16, 24], strides = [1, 1, 1]} : vector<8x18x24xf32> to vector<8x16x24xf32>
    %98 = vector.shape_cast %96 : vector<1x24xf32> to vector<1x1x24xf32>
    %99 = vector.broadcast %98 : vector<1x1x24xf32> to vector<8x16x24xf32>
    %100 = arith.mulf %97, %99 : vector<8x16x24xf32>
    %101 = arith.addf %95, %100 : vector<8x16x24xf32>
    %c8 = arith.constant 8 : index
    %c0_43 = arith.constant 0 : index
    %102 = vector.load %arg5[%c8, %c0_43] : memref<9x24xf32, #tpu.memory_space<vmem>>, vector<1x24xf32>
    %103 = vector.extract_strided_slice %52 {offsets = [0, 2, 0], sizes = [8, 16, 24], strides = [1, 1, 1]} : vector<8x18x24xf32> to vector<8x16x24xf32>
    %104 = vector.shape_cast %102 : vector<1x24xf32> to vector<1x1x24xf32>
    %105 = vector.broadcast %104 : vector<1x1x24xf32> to vector<8x16x24xf32>
    %106 = arith.mulf %103, %105 : vector<8x16x24xf32>
    %107 = arith.addf %101, %106 : vector<8x16x24xf32>
    %c0_44 = arith.constant 0 : index
    %c0_45 = arith.constant 0 : index
    %108 = vector.load %arg6[%c0_44, %c0_45] : memref<1x24xf32, #tpu.memory_space<vmem>>, vector<1x24xf32>
    %109 = vector.shape_cast %108 : vector<1x24xf32> to vector<1x1x24xf32>
    %110 = vector.broadcast %109 : vector<1x1x24xf32> to vector<8x16x24xf32>
    %111 = arith.addf %107, %110 : vector<8x16x24xf32>
    %cst_46 = arith.constant 0.000000e+00 : f32
    %112 = vector.broadcast %cst_46 : f32 to vector<8x16x24xf32>
    %113 = arith.maximumf %111, %112 : vector<8x16x24xf32>
    %114 = vector.shape_cast %113 : vector<8x16x24xf32> to vector<128x24xf32>
    %c0_47 = arith.constant 0 : index
    %c0_48 = arith.constant 0 : index
    %115 = vector.load %arg7[%c0_47, %c0_48] : memref<24x4xf32, #tpu.memory_space<vmem>>, vector<24x4xf32>
    %cst_49 = arith.constant dense<0.000000e+00> : vector<128x4xf32>
    %116 = tpu.matmul %114, %115, %cst_49 {dimension_numbers = #tpu.dot_dimension_numbers<[1], [0], [0], [1], [0, 0, 1, 1], [], []>} : vector<128x24xf32>, vector<24x4xf32>, vector<128x4xf32> -> vector<128x4xf32>
    %c0_50 = arith.constant 0 : index
    %c0_51 = arith.constant 0 : index
    %117 = vector.load %arg8[%c0_50, %c0_51] : memref<1x4xf32, #tpu.memory_space<vmem>>, vector<1x4xf32>
    %118 = vector.broadcast %117 : vector<1x4xf32> to vector<128x4xf32>
    %119 = arith.addf %116, %118 : vector<128x4xf32>
    %120 = vector.extract_strided_slice %4 {offsets = [1, 1, 0], sizes = [8, 16, 4], strides = [1, 1, 1]} : vector<10x18x4xf32> to vector<8x16x4xf32>
    %121 = vector.shape_cast %120 : vector<8x16x4xf32> to vector<128x4xf32>
    %122 = arith.addf %119, %121 : vector<128x4xf32>
    %123 = vector.shape_cast %122 : vector<128x4xf32> to vector<8x16x4xf32>
    %c0_52 = arith.constant 0 : index
    %c0_53 = arith.constant 0 : index
    %c0_54 = arith.constant 0 : index
    %c0_55 = arith.constant 0 : index
    %124 = vector.load %arg9[%c0_52, %c0_53, %c0_54, %c0_55] : memref<1x8x16x4xf32, #tpu.memory_space<vmem>>, vector<1x8x16x4xf32>
    %125 = vector.shape_cast %124 : vector<1x8x16x4xf32> to vector<8x16x4xf32>
    %126 = vector.shape_cast %123 : vector<8x16x4xf32> to vector<1x8x16x4xf32>
    tpu.vector_store %arg9[%c0_52, %c0_53, %c0_54, %c0_55], %126 {strides = array<i32>} : memref<1x8x16x4xf32, #tpu.memory_space<vmem>>, vector<1x8x16x4xf32>,
    return
  }
  func.func @transform_0(%arg0: i32, %arg1: i32) -> (i32, i32, i32, i32) {
    %c0_i32 = arith.constant 0 : i32
    %c0_i32_0 = arith.constant 0 : i32
    %c0_i32_1 = arith.constant 0 : i32
    %c0_i32_2 = arith.constant 0 : i32
    return %arg0, %c0_i32, %c0_i32_0, %c0_i32_1 : i32, i32, i32, i32
  }
  func.func @transform_1(%arg0: i32, %arg1: i32) -> (i32, i32) {
    %c0_i32 = arith.constant 0 : i32
    %c0_i32_0 = arith.constant 0 : i32
    %c0_i32_1 = arith.constant 0 : i32
    return %c0_i32, %c0_i32_0 : i32, i32
  }
  func.func @transform_2(%arg0: i32, %arg1: i32) -> (i32, i32) {
    %c0_i32 = arith.constant 0 : i32
    %c0_i32_0 = arith.constant 0 : i32
    %c0_i32_1 = arith.constant 0 : i32
    return %c0_i32, %c0_i32_0 : i32, i32
  }
  func.func @transform_3(%arg0: i32, %arg1: i32) -> (i32, i32) {
    %c0_i32 = arith.constant 0 : i32
    %c0_i32_0 = arith.constant 0 : i32
    %c0_i32_1 = arith.constant 0 : i32
    return %c0_i32, %c0_i32_0 : i32, i32
  }
  func.func @transform_4(%arg0: i32, %arg1: i32) -> (i32, i32) {
    %c0_i32 = arith.constant 0 : i32
    %c0_i32_0 = arith.constant 0 : i32
    %c0_i32_1 = arith.constant 0 : i32
    return %c0_i32, %c0_i32_0 : i32, i32
  }
  func.func @transform_5(%arg0: i32, %arg1: i32) -> (i32, i32) {
    %c0_i32 = arith.constant 0 : i32
    %c0_i32_0 = arith.constant 0 : i32
    %c0_i32_1 = arith.constant 0 : i32
    return %c0_i32, %c0_i32_0 : i32, i32
  }
  func.func @transform_6(%arg0: i32, %arg1: i32) -> (i32, i32) {
    %c0_i32 = arith.constant 0 : i32
    %c0_i32_0 = arith.constant 0 : i32
    %c0_i32_1 = arith.constant 0 : i32
    return %c0_i32, %c0_i32_0 : i32, i32
  }
  func.func @transform_7(%arg0: i32, %arg1: i32) -> (i32, i32, i32, i32) {
    %c0_i32 = arith.constant 0 : i32
    %c0_i32_0 = arith.constant 0 : i32
    %c0_i32_1 = arith.constant 0 : i32
    return %arg0, %arg1, %c0_i32, %c0_i32_0 : i32, i32, i32, i32
  }
}

</mosaic_0001>

<llo_original>
// kernel: tpu_custom_call.1
$region0: #{tpu_custom_call.1}
  #allocation0 [shape = 'u32[]', space=smem, size = 0x4, offset = 0x4, fixed_abs, tag = 'smem constant byte address 0x4 - core index']
  #allocation1 [shape = 'u32[144,128]{1,0:T(1,128)}', space=vmem, size = 0x12000, scoped, tag = 'internal scratch']
  #allocation2 [shape = 'f32[10,18,24]{2,1,0:T(8,128)}', space=vmem, size = 0x1e000, scoped, tag = 'scratch operand']
  %s0 = inlined_call_operand.vmem [shape: f32[2,18,18,4], index: 0, kind: input, shape index: {}]
  %s1 = inlined_call_operand.vmem [shape: f32[4,24], index: 1, kind: input, shape index: {}]
  %s2 = inlined_call_operand.vmem [shape: f32[1,24], index: 2, kind: input, shape index: {}]
  %s3 = inlined_call_operand.vmem [shape: f32[9,24], index: 3, kind: input, shape index: {}]
  %s4 = inlined_call_operand.vmem [shape: f32[1,24], index: 4, kind: input, shape index: {}]
  %s5 = inlined_call_operand.vmem [shape: f32[24,4], index: 5, kind: input, shape index: {}]
  %s6 = inlined_call_operand.vmem [shape: f32[1,4], index: 6, kind: input, shape index: {}]
  %s7 = inlined_call_operand.vmem [shape: f32[2,16,16,4], index: 7, kind: output, shape index: {}]
  %s8 = sld [smem:[#allocation0]]
  $region69: #{tpu_custom_call.1} parent=0
    _
  %s10 = ssub.s32 1, %s8
  %s11 = scalar_select 0, %s10, %s8
  loop: start=0, step=1, limit=6
  $region2: #{tpu_custom_call.1} parent=0 // loop_pre_header
    _
  $region3: #{tpu_custom_call.1} parent=0 // loop_header
    %s13 = sphi 0, %s17
    %p14 = scmp.ge.s32.totalorder %s13, 6
    %s20 = sphi 0, %s32
    %s21 = sphi 0, %s28
    %s22 = sphi 0, %s20
    %s23 = sphi 0, %s21
    %s24 = sphi 0, %s22
    %s25 = sphi 0, %s23
    %s35 = sphi 0, %s37
    %s38 = sphi 0, %s35
    %s39 = sphi 0, %s38
    %s55 = sphi 0, %s39
    %s59 = sphi 0, %s59
    %s61 = sphi 0, %s59
    %s62 = sphi 0, %s61
    %s76 = sphi 0, %s62
    %s80 = sphi 0, %s80
    %s82 = sphi 0, %s80
    %s83 = sphi 0, %s82
    %s97 = sphi 0, %s83
    %s101 = sphi 0, %s101
    %s103 = sphi 0, %s101
    %s104 = sphi 0, %s103
    %s118 = sphi 0, %s104
    %s122 = sphi 0, %s122
    %s124 = sphi 0, %s122
    %s125 = sphi 0, %s124
    %s139 = sphi 0, %s125
    %s143 = sphi 0, %s143
    %s145 = sphi 0, %s143
    %s146 = sphi 0, %s145
    %s160 = sphi 0, %s146
    %s164 = sphi 0, %s164
    %s166 = sphi 0, %s164
    %s167 = sphi 0, %s166
    %s181 = sphi 0, %s167
    %s189 = sphi 0, %s191
    %s192 = sphi 0, %s189
    %s193 = sphi 0, %s192
    %s209 = sphi 0, %s193
  $region4: #{tpu_custom_call.1} parent=0 // loop_header_branch
    %16 = sbr.rel (%p14) target = $region8
  $region5: #{tpu_custom_call.1} parent=0 // loop_body
    %s18 = ssub.s32 %s13, 1
    %s19 = ssub.s32 %s13, 2
    %s26 = sadd.s32 1, %s21
    %p27 = scmp.ge.s32.totalorder %s26, 2
    %s28 = scalar_select %p27, 0, %s26
    %s29 = sadd.s32 1, %s20
    %s30 = scalar_select %p27, %s29, %s20
    %p31 = scmp.ge.s32.totalorder %s30, 2
    %s32 = scalar_select %p31, 0, %s30
    %s33 = ssub.s32 %s20, %s32
    %p34 = scmp.eq.s32.totalorder %s33, 0
    %s36 = sadd.s32 %s35, 1
    %s37 = scalar_select %p34, %s35, %s36
    %p40 = pneg %p34
    %p41 = scmp.eq.s32.totalorder %s13, 3
    %p42 = por %p40, %p41
    %p43 = scmp.ne.s32.totalorder %s35, %s38
    %p44 = scmp.eq.s32.totalorder %s13, 0
    %p45 = por %p43, %p44
    %p46 = scmp.ne.s32.totalorder %s35, %s38
    %p47 = scmp.eq.s32.totalorder %s18, 3
    %p48 = por %p46, %p47
    %p49 = scmp.ne.s32.totalorder %s38, %s39
    %p50 = scmp.eq.s32.totalorder %s18, 0
    %p51 = por %p49, %p50
    %p52 = scmp.ne.s32.totalorder %s38, %s39
    %p53 = scmp.eq.s32.totalorder %s19, 3
    %p54 = por %p52, %p53
    %p56 = scmp.ne.s32.totalorder %s39, %s55
    %p57 = scmp.eq.s32.totalorder %s19, 0
    %p58 = por %p56, %p57
    %s60 = sadd.s32 %s59, 1
    %p63 = scmp.eq.s32.totalorder %s13, 3
    %p64 = scmp.ne.s32.totalorder %s59, %s61
    %p65 = scmp.eq.s32.totalorder %s13, 0
    %p66 = por %p64, %p65
    %p67 = scmp.ne.s32.totalorder %s59, %s61
    %p68 = scmp.eq.s32.totalorder %s18, 3
    %p69 = por %p67, %p68
    %p70 = scmp.ne.s32.totalorder %s61, %s62
    %p71 = scmp.eq.s32.totalorder %s18, 0
    %p72 = por %p70, %p71
    %p73 = scmp.ne.s32.totalorder %s61, %s62
    %p74 = scmp.eq.s32.totalorder %s19, 3
    %p75 = por %p73, %p74
    %p77 = scmp.ne.s32.totalorder %s62, %s76
    %p78 = scmp.eq.s32.totalorder %s19, 0
    %p79 = por %p77, %p78
    %s81 = sadd.s32 %s80, 1
    %p84 = scmp.eq.s32.totalorder %s13, 3
    %p85 = scmp.ne.s32.totalorder %s80, %s82
    %p86 = scmp.eq.s32.totalorder %s13, 0
    %p87 = por %p85, %p86
    %p88 = scmp.ne.s32.totalorder %s80, %s82
    %p89 = scmp.eq.s32.totalorder %s18, 3
    %p90 = por %p88, %p89
    %p91 = scmp.ne.s32.totalorder %s82, %s83
    %p92 = scmp.eq.s32.totalorder %s18, 0
    %p93 = por %p91, %p92
    %p94 = scmp.ne.s32.totalorder %s82, %s83
    %p95 = scmp.eq.s32.totalorder %s19, 3
    %p96 = por %p94, %p95
    %p98 = scmp.ne.s32.totalorder %s83, %s97
    %p99 = scmp.eq.s32.totalorder %s19, 0
    %p100 = por %p98, %p99
    %s102 = sadd.s32 %s101, 1
    %p105 = scmp.eq.s32.totalorder %s13, 3
    %p106 = scmp.ne.s32.totalorder %s101, %s103
    %p107 = scmp.eq.s32.totalorder %s13, 0
    %p108 = por %p106, %p107
    %p109 = scmp.ne.s32.totalorder %s101, %s103
    %p110 = scmp.eq.s32.totalorder %s18, 3
    %p111 = por %p109, %p110
    %p112 = scmp.ne.s32.totalorder %s103, %s104
    %p113 = scmp.eq.s32.totalorder %s18, 0
    %p114 = por %p112, %p113
    %p115 = scmp.ne.s32.totalorder %s103, %s104
    %p116 = scmp.eq.s32.totalorder %s19, 3
    %p117 = por %p115, %p116
    %p119 = scmp.ne.s32.totalorder %s104, %s118
    %p120 = scmp.eq.s32.totalorder %s19, 0
    %p121 = por %p119, %p120
    %s123 = sadd.s32 %s122, 1
    %p126 = scmp.eq.s32.totalorder %s13, 3
    %p127 = scmp.ne.s32.totalorder %s122, %s124
    %p128 = scmp.eq.s32.totalorder %s13, 0
    %p129 = por %p127, %p128
    %p130 = scmp.ne.s32.totalorder %s122, %s124
    %p131 = scmp.eq.s32.totalorder %s18, 3
    %p132 = por %p130, %p131
    %p133 = scmp.ne.s32.totalorder %s124, %s125
    %p134 = scmp.eq.s32.totalorder %s18, 0
    %p135 = por %p133, %p134
    %p136 = scmp.ne.s32.totalorder %s124, %s125
    %p137 = scmp.eq.s32.totalorder %s19, 3
    %p138 = por %p136, %p137
    %p140 = scmp.ne.s32.totalorder %s125, %s139
    %p141 = scmp.eq.s32.totalorder %s19, 0
    %p142 = por %p140, %p141
    %s144 = sadd.s32 %s143, 1
    %p147 = scmp.eq.s32.totalorder %s13, 3
    %p148 = scmp.ne.s32.totalorder %s143, %s145
    %p149 = scmp.eq.s32.totalorder %s13, 0
    %p150 = por %p148, %p149
    %p151 = scmp.ne.s32.totalorder %s143, %s145
    %p152 = scmp.eq.s32.totalorder %s18, 3
    %p153 = por %p151, %p152
    %p154 = scmp.ne.s32.totalorder %s145, %s146
    %p155 = scmp.eq.s32.totalorder %s18, 0
    %p156 = por %p154, %p155
    %p157 = scmp.ne.s32.totalorder %s145, %s146
    %p158 = scmp.eq.s32.totalorder %s19, 3
    %p159 = por %p157, %p158
    %p161 = scmp.ne.s32.totalorder %s146, %s160
    %p162 = scmp.eq.s32.totalorder %s19, 0
    %p163 = por %p161, %p162
    %s165 = sadd.s32 %s164, 1
    %p168 = scmp.eq.s32.totalorder %s13, 3
    %p169 = scmp.ne.s32.totalorder %s164, %s166
    %p170 = scmp.eq.s32.totalorder %s13, 0
    %p171 = por %p169, %p170
    %p172 = scmp.ne.s32.totalorder %s164, %s166
    %p173 = scmp.eq.s32.totalorder %s18, 3
    %p174 = por %p172, %p173
    %p175 = scmp.ne.s32.totalorder %s166, %s167
    %p176 = scmp.eq.s32.totalorder %s18, 0
    %p177 = por %p175, %p176
    %p178 = scmp.ne.s32.totalorder %s166, %s167
    %p179 = scmp.eq.s32.totalorder %s19, 3
    %p180 = por %p178, %p179
    %p182 = scmp.ne.s32.totalorder %s167, %s181
    %p183 = scmp.eq.s32.totalorder %s19, 0
    %p184 = por %p182, %p183
    %s185 = ssub.s32 %s20, %s32
    %s186 = ssub.s32 %s21, %s28
    %s187 = sor.u32 %s185, %s186
    %p188 = scmp.eq.s32.totalorder %s187, 0
    %s190 = sadd.s32 %s189, 1
    %s191 = scalar_select %p188, %s189, %s190
    %p194 = pneg %p188
    %p195 = scmp.eq.s32.totalorder %s13, 3
    %p196 = por %p194, %p195
    %p197 = scmp.ne.s32.totalorder %s189, %s192
    %p198 = scmp.eq.s32.totalorder %s13, 0
    %p199 = por %p197, %p198
    %p200 = scmp.ne.s32.totalorder %s189, %s192
    %p201 = scmp.eq.s32.totalorder %s18, 3
    %p202 = por %p200, %p201
    %p203 = scmp.ne.s32.totalorder %s192, %s193
    %p204 = scmp.eq.s32.totalorder %s18, 0
    %p205 = por %p203, %p204
    %p206 = scmp.ne.s32.totalorder %s192, %s193
    %p207 = scmp.eq.s32.totalorder %s19, 3
    %p208 = por %p206, %p207
    %p210 = scmp.ne.s32.totalorder %s193, %s209
    %p211 = scmp.eq.s32.totalorder %s19, 0
    %p212 = por %p210, %p211
    %p213 = scmp.le.s32.totalorder 1, %s13
    %p214 = scmp.lt.s32.totalorder %s13, 5
    %p215 = pnand %p213, %p214
    %p216 = pneg %p215
    // Predicated region
    $region9: #{tpu_custom_call.1} parent=5 // pred_check
      _
    $region10: #{tpu_custom_call.1} parent=5 // pred_check_branch
      %218 = sbr.rel (%p215) target = $region12
    $region11: #{tpu_custom_call.1} parent=5 // pred_region
      %s219 = ssub.s32 %s13, 1
      // Predicated region
      $region13: #{tpu_custom_call.1} parent=11 // pred_check
        %p220 = pneg %p72
      $region14: #{tpu_custom_call.1} parent=11 // pred_check_branch
        %222 = sbr.rel (%p220) target = $region16
      $region15: #{tpu_custom_call.1} parent=11 // pred_region
        _
      $region16: #{tpu_custom_call.1} parent=11 // pred_fallthru
        _
      // Predicated region
      $region17: #{tpu_custom_call.1} parent=11 // pred_check
        %p223 = pneg %p93
      $region18: #{tpu_custom_call.1} parent=11 // pred_check_branch
        %225 = sbr.rel (%p223) target = $region20
      $region19: #{tpu_custom_call.1} parent=11 // pred_region
        _
      $region20: #{tpu_custom_call.1} parent=11 // pred_fallthru
        _
      // Predicated region
      $region21: #{tpu_custom_call.1} parent=11 // pred_check
        %p226 = pneg %p114
      $region22: #{tpu_custom_call.1} parent=11 // pred_check_branch
        %228 = sbr.rel (%p226) target = $region24
      $region23: #{tpu_custom_call.1} parent=11 // pred_region
        _
      $region24: #{tpu_custom_call.1} parent=11 // pred_fallthru
        _
      // Predicated region
      $region25: #{tpu_custom_call.1} parent=11 // pred_check
        %p229 = pneg %p135
      $region26: #{tpu_custom_call.1} parent=11 // pred_check_branch
        %231 = sbr.rel (%p229) target = $region28
      $region27: #{tpu_custom_call.1} parent=11 // pred_region
        _
      $region28: #{tpu_custom_call.1} parent=11 // pred_fallthru
        _
      // Predicated region
      $region29: #{tpu_custom_call.1} parent=11 // pred_check
        %p232 = pneg %p156
      $region30: #{tpu_custom_call.1} parent=11 // pred_check_branch
        %234 = sbr.rel (%p232) target = $region32
      $region31: #{tpu_custom_call.1} parent=11 // pred_region
        _
      $region32: #{tpu_custom_call.1} parent=11 // pred_fallthru
        _
      // Predicated region
      $region33: #{tpu_custom_call.1} parent=11 // pred_check
        %p235 = pneg %p177
      $region34: #{tpu_custom_call.1} parent=11 // pred_check_branch
        %237 = sbr.rel (%p235) target = $region36
      $region35: #{tpu_custom_call.1} parent=11 // pred_region
        _
      $region36: #{tpu_custom_call.1} parent=11 // pred_fallthru
        _
    $region12: #{tpu_custom_call.1} parent=5 // pred_fallthru
      _
    %p238 = scmp.lt.s32.totalorder %s13, 4
    // Predicated region
    $region37: #{tpu_custom_call.1} parent=5 // pred_check
      %p239 = pneg %p238
    $region38: #{tpu_custom_call.1} parent=5 // pred_check_branch
      %241 = sbr.rel (%p239) target = $region40
    $region39: #{tpu_custom_call.1} parent=5 // pred_region
      // Predicated region
      $region41: #{tpu_custom_call.1} parent=39 // pred_check
        %p242 = pneg %p45
      $region42: #{tpu_custom_call.1} parent=39 // pred_check_branch
        %244 = sbr.rel (%p242) target = $region44
      $region43: #{tpu_custom_call.1} parent=39 // pred_region
        %p245 = scmp.lt.s32.totalorder %s20, 1
        %s246 = scalar_select %p245, %s20, 1
        %s247 = smul.addr %s246, 54
        %s248 = smul.addr %s247, 8
        %s249 = scalar_lea.vmem %s0, %s248
      $region44: #{tpu_custom_call.1} parent=39 // pred_fallthru
        _
    $region40: #{tpu_custom_call.1} parent=5 // pred_fallthru
      _
    %p250 = scmp.le.s32.totalorder 1, %s13
    %p251 = scmp.lt.s32.totalorder %s13, 5
    %p252 = pnand %p250, %p251
    %p253 = pneg %p252
    // Predicated region
    $region45: #{tpu_custom_call.1} parent=5 // pred_check
      _
    $region46: #{tpu_custom_call.1} parent=5 // pred_check_branch
      %255 = sbr.rel (%p252) target = $region48
    $region47: #{tpu_custom_call.1} parent=5 // pred_region
      %s256 = ssub.s32 %s13, 1
      %p257 = scmp.lt.s32.totalorder %s22, 1
      %s258 = scalar_select %p257, %s22, 1
      %s259 = smul.addr %s258, 54
      %s260 = smul.addr %s259, 8
      %s261 = scalar_lea.vmem %s0, %s260
      %p262 = pneg %p51
      %p263 = pneg %p48
      %p264 = pneg %p72
      %p265 = pneg %p69
      %p266 = pneg %p93
      %p267 = pneg %p90
      %p268 = pneg %p114
      %p269 = pneg %p111
      %p270 = pneg %p135
      %p271 = pneg %p132
      %p272 = pneg %p156
      %p273 = pneg %p153
      %p274 = pneg %p177
      %p275 = pneg %p174
      %p276 = pneg %p205
      %p277 = pneg %p202
      %s278 = smul.u32 8, %s23
      %p279 = scmp.lt.s32.totalorder %s22, 1
      %s280 = scalar_select %p279, %s22, 1
      %p281 = scmp.lt.s32.totalorder %s278, 15
      %s282 = scalar_select %p281, %s278, 15
      %s283 = smul.addr %s282, 2
      %s284 = smul.addr %s280, 32
      %s285 = sadd.s32 %s283, %s284
      %s286 = smul.addr %s285, 8
      %s287 = scalar_lea.vmem %s7, %s286
      %p288 = scmp.lt.s32.totalorder %s22, 1
      %s289 = scalar_select %p288, %s22, 1
      %s290 = smul.addr %s289, 54
      %s291 = smul.addr %s290, 8
      %s292 = scalar_lea.vmem %s0, %s291
      %s293 = smul.u32 8, %s23
      %p294 = scmp.lt.s32.totalorder %s22, 1
      %s295 = scalar_select %p294, %s22, 1
      %p296 = scmp.lt.s32.totalorder %s293, 15
      %s297 = scalar_select %p296, %s293, 15
      %s298 = smul.addr %s297, 2
      %s299 = smul.addr %s295, 32
      %s300 = sadd.s32 %s298, %s299
      %s301 = smul.addr %s300, 8
      %s302 = scalar_lea.vmem %s7, %s301
      %s303 = smul.u32 8, %s23
      %s304 = smul.u32 %s23, 8
      %s305 = smul.u32 %s304, 24
      %s306 = scalar_lea.vmem %s292, %s305
      %v307 = vld [vmem:[%s306] sm:$0xff]
      %v308 = vld [vmem:[%s306 + $0x8] sm:$0xff]
      %v309 = vld [vmem:[%s306 + $0x10] sm:$0x3]
      %v310 = vld [vmem:[%s306 + $0x18] sm:$0xff]
      %v311 = vld [vmem:[%s306 + $0x20] sm:$0xff]
      %v312 = vld [vmem:[%s306 + $0x28] sm:$0x3]
      %v313 = vld [vmem:[%s306 + $0x30] sm:$0xff]
      %v314 = vld [vmem:[%s306 + $0x38] sm:$0xff]
      %v315 = vld [vmem:[%s306 + $0x40] sm:$0x3]
      %v316 = vld [vmem:[%s306 + $0x48] sm:$0xff]
      %v317 = vld [vmem:[%s306 + $0x50] sm:$0xff]
      %v318 = vld [vmem:[%s306 + $0x58] sm:$0x3]
      %v319 = vld [vmem:[%s306 + $0x60] sm:$0xff]
      %v320 = vld [vmem:[%s306 + $0x68] sm:$0xff]
      %v321 = vld [vmem:[%s306 + $0x70] sm:$0x3]
      %v322 = vld [vmem:[%s306 + $0x78] sm:$0xff]
      %v323 = vld [vmem:[%s306 + $0x80] sm:$0xff]
      %v324 = vld [vmem:[%s306 + $0x88] sm:$0x3]
      %v325 = vld [vmem:[%s306 + $0x90] sm:$0xff]
      %v326 = vld [vmem:[%s306 + $0x98] sm:$0xff]
      %v327 = vld [vmem:[%s306 + $0xa0] sm:$0x3]
      %v328 = vld [vmem:[%s306 + $0xa8] sm:$0xff]
      %v329 = vld [vmem:[%s306 + $0xb0] sm:$0xff]
      %v330 = vld [vmem:[%s306 + $0xb8] sm:$0x3]
      %v331 = vld [vmem:[%s306 + $0xc0] sm:$0xff]
      %v332 = vld [vmem:[%s306 + $0xc8] sm:$0xff]
      %v333 = vld [vmem:[%s306 + $0xd0] sm:$0x3]
      %v334 = vld [vmem:[%s306 + $0xd8] sm:$0xff]
      %v335 = vld [vmem:[%s306 + $0xe0] sm:$0xff]
      %v336 = vld [vmem:[%s306 + $0xe8] sm:$0x3]
      %v337 = vld [vmem:[%s1] sm:$0x1]
      %339 = vset.pattern.permute.xlu0 0
      %340 = vperm.xlu0 %339, %v307
      %v341 = vpop.permute.xlu0 %340
      %344 = vset.pattern.permute.xlu0 0
      %345 = vperm.xlu0 %344, %v308
      %v346 = vpop.permute.xlu0 %345
      %349 = vset.pattern.permute.xlu0 0
      %350 = vperm.xlu0 %349, %v309
      %v351 = vpop.permute.xlu0 %350
      %354 = vset.pattern.permute.xlu0 0
      %355 = vperm.xlu0 %354, %v310
      %v356 = vpop.permute.xlu0 %355
      %359 = vset.pattern.permute.xlu0 0
      %360 = vperm.xlu0 %359, %v311
      %v361 = vpop.permute.xlu0 %360
      %364 = vset.pattern.permute.xlu0 0
      %365 = vperm.xlu0 %364, %v312
      %v366 = vpop.permute.xlu0 %365
      %369 = vset.pattern.permute.xlu0 0
      %370 = vperm.xlu0 %369, %v313
      %v371 = vpop.permute.xlu0 %370
      %374 = vset.pattern.permute.xlu0 0
      %375 = vperm.xlu0 %374, %v314
      %v376 = vpop.permute.xlu0 %375
      %379 = vset.pattern.permute.xlu0 0
      %380 = vperm.xlu0 %379, %v315
      %v381 = vpop.permute.xlu0 %380
      %384 = vset.pattern.permute.xlu0 0
      %385 = vperm.xlu0 %384, %v316
      %v386 = vpop.permute.xlu0 %385
      %389 = vset.pattern.permute.xlu0 0
      %390 = vperm.xlu0 %389, %v317
      %v391 = vpop.permute.xlu0 %390
      %394 = vset.pattern.permute.xlu0 0
      %395 = vperm.xlu0 %394, %v318
      %v396 = vpop.permute.xlu0 %395
      %399 = vset.pattern.permute.xlu0 0
      %400 = vperm.xlu0 %399, %v319
      %v401 = vpop.permute.xlu0 %400
      %404 = vset.pattern.permute.xlu0 0
      %405 = vperm.xlu0 %404, %v320
      %v406 = vpop.permute.xlu0 %405
      %409 = vset.pattern.permute.xlu0 0
      %410 = vperm.xlu0 %409, %v321
      %v411 = vpop.permute.xlu0 %410
      %414 = vset.pattern.permute.xlu0 0
      %415 = vperm.xlu0 %414, %v322
      %v416 = vpop.permute.xlu0 %415
      %419 = vset.pattern.permute.xlu0 0
      %420 = vperm.xlu0 %419, %v323
      %v421 = vpop.permute.xlu0 %420
      %424 = vset.pattern.permute.xlu0 0
      %425 = vperm.xlu0 %424, %v324
      %v426 = vpop.permute.xlu0 %425
      %429 = vset.pattern.permute.xlu0 0
      %430 = vperm.xlu0 %429, %v325
      %v431 = vpop.permute.xlu0 %430
      %434 = vset.pattern.permute.xlu0 0
      %435 = vperm.xlu0 %434, %v326
      %v436 = vpop.permute.xlu0 %435
      %439 = vset.pattern.permute.xlu0 0
      %440 = vperm.xlu0 %439, %v327
      %v441 = vpop.permute.xlu0 %440
      %444 = vset.pattern.permute.xlu0 0
      %445 = vperm.xlu0 %444, %v328
      %v446 = vpop.permute.xlu0 %445
      %449 = vset.pattern.permute.xlu0 0
      %450 = vperm.xlu0 %449, %v329
      %v451 = vpop.permute.xlu0 %450
      %454 = vset.pattern.permute.xlu0 0
      %455 = vperm.xlu0 %454, %v330
      %v456 = vpop.permute.xlu0 %455
      %459 = vset.pattern.permute.xlu0 0
      %460 = vperm.xlu0 %459, %v331
      %v461 = vpop.permute.xlu0 %460
      %464 = vset.pattern.permute.xlu0 0
      %465 = vperm.xlu0 %464, %v332
      %v466 = vpop.permute.xlu0 %465
      %469 = vset.pattern.permute.xlu0 0
      %470 = vperm.xlu0 %469, %v333
      %v471 = vpop.permute.xlu0 %470
      %474 = vset.pattern.permute.xlu0 0
      %475 = vperm.xlu0 %474, %v334
      %v476 = vpop.permute.xlu0 %475
      %479 = vset.pattern.permute.xlu0 0
      %480 = vperm.xlu0 %479, %v335
      %v481 = vpop.permute.xlu0 %480
      %484 = vset.pattern.permute.xlu0 0
      %485 = vperm.xlu0 %484, %v336
      %v486 = vpop.permute.xlu0 %485
      %v488 = vlaneseq
      %v489 = vshrl.u32 %v488, 7
      %v490 = vsub.s32 0, %v489
      %v491 = vrot.slane %v337, %v490
      %v492 = vmul.f32 %v341, %v491
      %v493 = vmul.f32 %v346, %v491
      %v494 = vmul.f32 %v351, %v491
      %v495 = vmul.f32 %v356, %v491
      %v496 = vmul.f32 %v361, %v491
      %v497 = vmul.f32 %v366, %v491
      %v498 = vmul.f32 %v371, %v491
      %v499 = vmul.f32 %v376, %v491
      %v500 = vmul.f32 %v381, %v491
      %v501 = vmul.f32 %v386, %v491
      %v502 = vmul.f32 %v391, %v491
      %v503 = vmul.f32 %v396, %v491
      %v504 = vmul.f32 %v401, %v491
      %v505 = vmul.f32 %v406, %v491
      %v506 = vmul.f32 %v411, %v491
      %v507 = vmul.f32 %v416, %v491
      %v508 = vmul.f32 %v421, %v491
      %v509 = vmul.f32 %v426, %v491
      %v510 = vmul.f32 %v431, %v491
      %v511 = vmul.f32 %v436, %v491
      %v512 = vmul.f32 %v441, %v491
      %v513 = vmul.f32 %v446, %v491
      %v514 = vmul.f32 %v451, %v491
      %v515 = vmul.f32 %v456, %v491
      %v516 = vmul.f32 %v461, %v491
      %v517 = vmul.f32 %v466, %v491
      %v518 = vmul.f32 %v471, %v491
      %v519 = vmul.f32 %v476, %v491
      %v520 = vmul.f32 %v481, %v491
      %v521 = vmul.f32 %v486, %v491
      %v522 = vadd.f32 %v492, 0.0
      %v523 = vadd.f32 %v493, 0.0
      %v524 = vadd.f32 %v494, 0.0
      %v525 = vadd.f32 %v495, 0.0
      %v526 = vadd.f32 %v496, 0.0
      %v527 = vadd.f32 %v497, 0.0
      %v528 = vadd.f32 %v498, 0.0
      %v529 = vadd.f32 %v499, 0.0
      %v530 = vadd.f32 %v500, 0.0
      %v531 = vadd.f32 %v501, 0.0
      %v532 = vadd.f32 %v502, 0.0
      %v533 = vadd.f32 %v503, 0.0
      %v534 = vadd.f32 %v504, 0.0
      %v535 = vadd.f32 %v505, 0.0
      %v536 = vadd.f32 %v506, 0.0
      %v537 = vadd.f32 %v507, 0.0
      %v538 = vadd.f32 %v508, 0.0
      %v539 = vadd.f32 %v509, 0.0
      %v540 = vadd.f32 %v510, 0.0
      %v541 = vadd.f32 %v511, 0.0
      %v542 = vadd.f32 %v512, 0.0
      %v543 = vadd.f32 %v513, 0.0
      %v544 = vadd.f32 %v514, 0.0
      %v545 = vadd.f32 %v515, 0.0
      %v546 = vadd.f32 %v516, 0.0
      %v547 = vadd.f32 %v517, 0.0
      %v548 = vadd.f32 %v518, 0.0
      %v549 = vadd.f32 %v519, 0.0
      %v550 = vadd.f32 %v520, 0.0
      %v551 = vadd.f32 %v521, 0.0
      %v552 = vld [vmem:[%s1 + $0x1] sm:$0x1]
      %553 = vset.pattern.permute.xlu0 1
      %554 = vperm.xlu0 %553, %v307
      %v555 = vpop.permute.xlu0 %554
      %557 = vset.pattern.permute.xlu0 1
      %558 = vperm.xlu0 %557, %v308
      %v559 = vpop.permute.xlu0 %558
      %561 = vset.pattern.permute.xlu0 1
      %562 = vperm.xlu0 %561, %v309
      %v563 = vpop.permute.xlu0 %562
      %565 = vset.pattern.permute.xlu0 1
      %566 = vperm.xlu0 %565, %v310
      %v567 = vpop.permute.xlu0 %566
      %569 = vset.pattern.permute.xlu0 1
      %570 = vperm.xlu0 %569, %v311
      %v571 = vpop.permute.xlu0 %570
      %573 = vset.pattern.permute.xlu0 1
      %574 = vperm.xlu0 %573, %v312
      %v575 = vpop.permute.xlu0 %574
      %577 = vset.pattern.permute.xlu0 1
      %578 = vperm.xlu0 %577, %v313
      %v579 = vpop.permute.xlu0 %578
      %581 = vset.pattern.permute.xlu0 1
      %582 = vperm.xlu0 %581, %v314
      %v583 = vpop.permute.xlu0 %582
      %585 = vset.pattern.permute.xlu0 1
      %586 = vperm.xlu0 %585, %v315
      %v587 = vpop.permute.xlu0 %586
      %589 = vset.pattern.permute.xlu0 1
      %590 = vperm.xlu0 %589, %v316
      %v591 = vpop.permute.xlu0 %590
      %593 = vset.pattern.permute.xlu0 1
      %594 = vperm.xlu0 %593, %v317
      %v595 = vpop.permute.xlu0 %594
      %597 = vset.pattern.permute.xlu0 1
      %598 = vperm.xlu0 %597, %v318
      %v599 = vpop.permute.xlu0 %598
      %601 = vset.pattern.permute.xlu0 1
      %602 = vperm.xlu0 %601, %v319
      %v603 = vpop.permute.xlu0 %602
      %605 = vset.pattern.permute.xlu0 1
      %606 = vperm.xlu0 %605, %v320
      %v607 = vpop.permute.xlu0 %606
      %609 = vset.pattern.permute.xlu0 1
      %610 = vperm.xlu0 %609, %v321
      %v611 = vpop.permute.xlu0 %610
      %613 = vset.pattern.permute.xlu0 1
      %614 = vperm.xlu0 %613, %v322
      %v615 = vpop.permute.xlu0 %614
      %617 = vset.pattern.permute.xlu0 1
      %618 = vperm.xlu0 %617, %v323
      %v619 = vpop.permute.xlu0 %618
      %621 = vset.pattern.permute.xlu0 1
      %622 = vperm.xlu0 %621, %v324
      %v623 = vpop.permute.xlu0 %622
      %625 = vset.pattern.permute.xlu0 1
      %626 = vperm.xlu0 %625, %v325
      %v627 = vpop.permute.xlu0 %626
      %629 = vset.pattern.permute.xlu0 1
      %630 = vperm.xlu0 %629, %v326
      %v631 = vpop.permute.xlu0 %630
      %633 = vset.pattern.permute.xlu0 1
      %634 = vperm.xlu0 %633, %v327
      %v635 = vpop.permute.xlu0 %634
      %637 = vset.pattern.permute.xlu0 1
      %638 = vperm.xlu0 %637, %v328
      %v639 = vpop.permute.xlu0 %638
      %641 = vset.pattern.permute.xlu0 1
      %642 = vperm.xlu0 %641, %v329
      %v643 = vpop.permute.xlu0 %642
      %645 = vset.pattern.permute.xlu0 1
      %646 = vperm.xlu0 %645, %v330
      %v647 = vpop.permute.xlu0 %646
      %649 = vset.pattern.permute.xlu0 1
      %650 = vperm.xlu0 %649, %v331
      %v651 = vpop.permute.xlu0 %650
      %653 = vset.pattern.permute.xlu0 1
      %654 = vperm.xlu0 %653, %v332
      %v655 = vpop.permute.xlu0 %654
      %657 = vset.pattern.permute.xlu0 1
      %658 = vperm.xlu0 %657, %v333
      %v659 = vpop.permute.xlu0 %658
      %661 = vset.pattern.permute.xlu0 1
      %662 = vperm.xlu0 %661, %v334
      %v663 = vpop.permute.xlu0 %662
      %665 = vset.pattern.permute.xlu0 1
      %666 = vperm.xlu0 %665, %v335
      %v667 = vpop.permute.xlu0 %666
      %669 = vset.pattern.permute.xlu0 1
      %670 = vperm.xlu0 %669, %v336
      %v671 = vpop.permute.xlu0 %670
      %v673 = vlaneseq
      %v674 = vshrl.u32 %v673, 7
      %v675 = vsub.s32 0, %v674
      %v676 = vrot.slane %v552, %v675
      %v677 = vmul.f32 %v555, %v676
      %v678 = vmul.f32 %v559, %v676
      %v679 = vmul.f32 %v563, %v676
      %v680 = vmul.f32 %v567, %v676
      %v681 = vmul.f32 %v571, %v676
      %v682 = vmul.f32 %v575, %v676
      %v683 = vmul.f32 %v579, %v676
      %v684 = vmul.f32 %v583, %v676
      %v685 = vmul.f32 %v587, %v676
      %v686 = vmul.f32 %v591, %v676
      %v687 = vmul.f32 %v595, %v676
      %v688 = vmul.f32 %v599, %v676
      %v689 = vmul.f32 %v603, %v676
      %v690 = vmul.f32 %v607, %v676
      %v691 = vmul.f32 %v611, %v676
      %v692 = vmul.f32 %v615, %v676
      %v693 = vmul.f32 %v619, %v676
      %v694 = vmul.f32 %v623, %v676
      %v695 = vmul.f32 %v627, %v676
      %v696 = vmul.f32 %v631, %v676
      %v697 = vmul.f32 %v635, %v676
      %v698 = vmul.f32 %v639, %v676
      %v699 = vmul.f32 %v643, %v676
      %v700 = vmul.f32 %v647, %v676
      %v701 = vmul.f32 %v651, %v676
      %v702 = vmul.f32 %v655, %v676
      %v703 = vmul.f32 %v659, %v676
      %v704 = vmul.f32 %v663, %v676
      %v705 = vmul.f32 %v667, %v676
      %v706 = vmul.f32 %v671, %v676
      %v707 = vadd.f32 %v522, %v677
      %v708 = vadd.f32 %v523, %v678
      %v709 = vadd.f32 %v524, %v679
      %v710 = vadd.f32 %v525, %v680
      %v711 = vadd.f32 %v526, %v681
      %v712 = vadd.f32 %v527, %v682
      %v713 = vadd.f32 %v528, %v683
      %v714 = vadd.f32 %v529, %v684
      %v715 = vadd.f32 %v530, %v685
      %v716 = vadd.f32 %v531, %v686
      %v717 = vadd.f32 %v532, %v687
      %v718 = vadd.f32 %v533, %v688
      %v719 = vadd.f32 %v534, %v689
      %v720 = vadd.f32 %v535, %v690
      %v721 = vadd.f32 %v536, %v691
      %v722 = vadd.f32 %v537, %v692
      %v723 = vadd.f32 %v538, %v693
      %v724 = vadd.f32 %v539, %v694
      %v725 = vadd.f32 %v540, %v695
      %v726 = vadd.f32 %v541, %v696
      %v727 = vadd.f32 %v542, %v697
      %v728 = vadd.f32 %v543, %v698
      %v729 = vadd.f32 %v544, %v699
      %v730 = vadd.f32 %v545, %v700
      %v731 = vadd.f32 %v546, %v701
      %v732 = vadd.f32 %v547, %v702
      %v733 = vadd.f32 %v548, %v703
      %v734 = vadd.f32 %v549, %v704
      %v735 = vadd.f32 %v550, %v705
      %v736 = vadd.f32 %v551, %v706
      %v737 = vld [vmem:[%s1 + $0x2] sm:$0x1]
      %738 = vset.pattern.permute.xlu0 2
      %739 = vperm.xlu0 %738, %v307
      %v740 = vpop.permute.xlu0 %739
      %742 = vset.pattern.permute.xlu0 2
      %743 = vperm.xlu0 %742, %v308
      %v744 = vpop.permute.xlu0 %743
      %746 = vset.pattern.permute.xlu0 2
      %747 = vperm.xlu0 %746, %v309
      %v748 = vpop.permute.xlu0 %747
      %750 = vset.pattern.permute.xlu0 2
      %751 = vperm.xlu0 %750, %v310
      %v752 = vpop.permute.xlu0 %751
      %754 = vset.pattern.permute.xlu0 2
      %755 = vperm.xlu0 %754, %v311
      %v756 = vpop.permute.xlu0 %755
      %758 = vset.pattern.permute.xlu0 2
      %759 = vperm.xlu0 %758, %v312
      %v760 = vpop.permute.xlu0 %759
      %762 = vset.pattern.permute.xlu0 2
      %763 = vperm.xlu0 %762, %v313
      %v764 = vpop.permute.xlu0 %763
      %766 = vset.pattern.permute.xlu0 2
      %767 = vperm.xlu0 %766, %v314
      %v768 = vpop.permute.xlu0 %767
      %770 = vset.pattern.permute.xlu0 2
      %771 = vperm.xlu0 %770, %v315
      %v772 = vpop.permute.xlu0 %771
      %774 = vset.pattern.permute.xlu0 2
      %775 = vperm.xlu0 %774, %v316
      %v776 = vpop.permute.xlu0 %775
      %778 = vset.pattern.permute.xlu0 2
      %779 = vperm.xlu0 %778, %v317
      %v780 = vpop.permute.xlu0 %779
      %782 = vset.pattern.permute.xlu0 2
      %783 = vperm.xlu0 %782, %v318
      %v784 = vpop.permute.xlu0 %783
      %786 = vset.pattern.permute.xlu0 2
      %787 = vperm.xlu0 %786, %v319
      %v788 = vpop.permute.xlu0 %787
      %790 = vset.pattern.permute.xlu0 2
      %791 = vperm.xlu0 %790, %v320
      %v792 = vpop.permute.xlu0 %791
      %794 = vset.pattern.permute.xlu0 2
      %795 = vperm.xlu0 %794, %v321
      %v796 = vpop.permute.xlu0 %795
      %798 = vset.pattern.permute.xlu0 2
      %799 = vperm.xlu0 %798, %v322
      %v800 = vpop.permute.xlu0 %799
      %802 = vset.pattern.permute.xlu0 2
      %803 = vperm.xlu0 %802, %v323
      %v804 = vpop.permute.xlu0 %803
      %806 = vset.pattern.permute.xlu0 2
      %807 = vperm.xlu0 %806, %v324
      %v808 = vpop.permute.xlu0 %807
      %810 = vset.pattern.permute.xlu0 2
      %811 = vperm.xlu0 %810, %v325
      %v812 = vpop.permute.xlu0 %811
      %814 = vset.pattern.permute.xlu0 2
      %815 = vperm.xlu0 %814, %v326
      %v816 = vpop.permute.xlu0 %815
      %818 = vset.pattern.permute.xlu0 2
      %819 = vperm.xlu0 %818, %v327
      %v820 = vpop.permute.xlu0 %819
      %822 = vset.pattern.permute.xlu0 2
      %823 = vperm.xlu0 %822, %v328
      %v824 = vpop.permute.xlu0 %823
      %826 = vset.pattern.permute.xlu0 2
      %827 = vperm.xlu0 %826, %v329
      %v828 = vpop.permute.xlu0 %827
      %830 = vset.pattern.permute.xlu0 2
      %831 = vperm.xlu0 %830, %v330
      %v832 = vpop.permute.xlu0 %831
      %834 = vset.pattern.permute.xlu0 2
      %835 = vperm.xlu0 %834, %v331
      %v836 = vpop.permute.xlu0 %835
      %838 = vset.pattern.permute.xlu0 2
      %839 = vperm.xlu0 %838, %v332
      %v840 = vpop.permute.xlu0 %839
      %842 = vset.pattern.permute.xlu0 2
      %843 = vperm.xlu0 %842, %v333
      %v844 = vpop.permute.xlu0 %843
      %846 = vset.pattern.permute.xlu0 2
      %847 = vperm.xlu0 %846, %v334
      %v848 = vpop.permute.xlu0 %847
      %850 = vset.pattern.permute.xlu0 2
      %851 = vperm.xlu0 %850, %v335
      %v852 = vpop.permute.xlu0 %851
      %854 = vset.pattern.permute.xlu0 2
      %855 = vperm.xlu0 %854, %v336
      %v856 = vpop.permute.xlu0 %855
      %v858 = vlaneseq
      %v859 = vshrl.u32 %v858, 7
      %v860 = vsub.s32 0, %v859
      %v861 = vrot.slane %v737, %v860
      %v862 = vmul.f32 %v740, %v861
      %v863 = vmul.f32 %v744, %v861
      %v864 = vmul.f32 %v748, %v861
      %v865 = vmul.f32 %v752, %v861
      %v866 = vmul.f32 %v756, %v861
      %v867 = vmul.f32 %v760, %v861
      %v868 = vmul.f32 %v764, %v861
      %v869 = vmul.f32 %v768, %v861
      %v870 = vmul.f32 %v772, %v861
      %v871 = vmul.f32 %v776, %v861
      %v872 = vmul.f32 %v780, %v861
      %v873 = vmul.f32 %v784, %v861
      %v874 = vmul.f32 %v788, %v861
      %v875 = vmul.f32 %v792, %v861
      %v876 = vmul.f32 %v796, %v861
      %v877 = vmul.f32 %v800, %v861
      %v878 = vmul.f32 %v804, %v861
      %v879 = vmul.f32 %v808, %v861
      %v880 = vmul.f32 %v812, %v861
      %v881 = vmul.f32 %v816, %v861
      %v882 = vmul.f32 %v820, %v861
      %v883 = vmul.f32 %v824, %v861
      %v884 = vmul.f32 %v828, %v861
      %v885 = vmul.f32 %v832, %v861
      %v886 = vmul.f32 %v836, %v861
      %v887 = vmul.f32 %v840, %v861
      %v888 = vmul.f32 %v844, %v861
      %v889 = vmul.f32 %v848, %v861
      %v890 = vmul.f32 %v852, %v861
      %v891 = vmul.f32 %v856, %v861
      %v892 = vadd.f32 %v707, %v862
      %v893 = vadd.f32 %v708, %v863
      %v894 = vadd.f32 %v709, %v864
      %v895 = vadd.f32 %v710, %v865
      %v896 = vadd.f32 %v711, %v866
      %v897 = vadd.f32 %v712, %v867
      %v898 = vadd.f32 %v713, %v868
      %v899 = vadd.f32 %v714, %v869
      %v900 = vadd.f32 %v715, %v870
      %v901 = vadd.f32 %v716, %v871
      %v902 = vadd.f32 %v717, %v872
      %v903 = vadd.f32 %v718, %v873
      %v904 = vadd.f32 %v719, %v874
      %v905 = vadd.f32 %v720, %v875
      %v906 = vadd.f32 %v721, %v876
      %v907 = vadd.f32 %v722, %v877
      %v908 = vadd.f32 %v723, %v878
      %v909 = vadd.f32 %v724, %v879
      %v910 = vadd.f32 %v725, %v880
      %v911 = vadd.f32 %v726, %v881
      %v912 = vadd.f32 %v727, %v882
      %v913 = vadd.f32 %v728, %v883
      %v914 = vadd.f32 %v729, %v884
      %v915 = vadd.f32 %v730, %v885
      %v916 = vadd.f32 %v731, %v886
      %v917 = vadd.f32 %v732, %v887
      %v918 = vadd.f32 %v733, %v888
      %v919 = vadd.f32 %v734, %v889
      %v920 = vadd.f32 %v735, %v890
      %v921 = vadd.f32 %v736, %v891
      %v922 = vld [vmem:[%s1 + $0x3] sm:$0x1]
      %923 = vset.pattern.permute.xlu0 3
      %924 = vperm.xlu0 %923, %v307
      %v925 = vpop.permute.xlu0 %924
      %927 = vset.pattern.permute.xlu0 3
      %928 = vperm.xlu0 %927, %v308
      %v929 = vpop.permute.xlu0 %928
      %931 = vset.pattern.permute.xlu0 3
      %932 = vperm.xlu0 %931, %v309
      %v933 = vpop.permute.xlu0 %932
      %935 = vset.pattern.permute.xlu0 3
      %936 = vperm.xlu0 %935, %v310
      %v937 = vpop.permute.xlu0 %936
      %939 = vset.pattern.permute.xlu0 3
      %940 = vperm.xlu0 %939, %v311
      %v941 = vpop.permute.xlu0 %940
      %943 = vset.pattern.permute.xlu0 3
      %944 = vperm.xlu0 %943, %v312
      %v945 = vpop.permute.xlu0 %944
      %947 = vset.pattern.permute.xlu0 3
      %948 = vperm.xlu0 %947, %v313
      %v949 = vpop.permute.xlu0 %948
      %951 = vset.pattern.permute.xlu0 3
      %952 = vperm.xlu0 %951, %v314
      %v953 = vpop.permute.xlu0 %952
      %955 = vset.pattern.permute.xlu0 3
      %956 = vperm.xlu0 %955, %v315
      %v957 = vpop.permute.xlu0 %956
      %959 = vset.pattern.permute.xlu0 3
      %960 = vperm.xlu0 %959, %v316
      %v961 = vpop.permute.xlu0 %960
      %963 = vset.pattern.permute.xlu0 3
      %964 = vperm.xlu0 %963, %v317
      %v965 = vpop.permute.xlu0 %964
      %967 = vset.pattern.permute.xlu0 3
      %968 = vperm.xlu0 %967, %v318
      %v969 = vpop.permute.xlu0 %968
      %971 = vset.pattern.permute.xlu0 3
      %972 = vperm.xlu0 %971, %v319
      %v973 = vpop.permute.xlu0 %972
      %975 = vset.pattern.permute.xlu0 3
      %976 = vperm.xlu0 %975, %v320
      %v977 = vpop.permute.xlu0 %976
      %979 = vset.pattern.permute.xlu0 3
      %980 = vperm.xlu0 %979, %v321
      %v981 = vpop.permute.xlu0 %980
      %983 = vset.pattern.permute.xlu0 3
      %984 = vperm.xlu0 %983, %v322
      %v985 = vpop.permute.xlu0 %984
      %987 = vset.pattern.permute.xlu0 3
      %988 = vperm.xlu0 %987, %v323
      %v989 = vpop.permute.xlu0 %988
      %991 = vset.pattern.permute.xlu0 3
      %992 = vperm.xlu0 %991, %v324
      %v993 = vpop.permute.xlu0 %992
      %995 = vset.pattern.permute.xlu0 3
      %996 = vperm.xlu0 %995, %v325
      %v997 = vpop.permute.xlu0 %996
      %999 = vset.pattern.permute.xlu0 3
      %1000 = vperm.xlu0 %999, %v326
      %v1001 = vpop.permute.xlu0 %1000
      %1003 = vset.pattern.permute.xlu0 3
      %1004 = vperm.xlu0 %1003, %v327
      %v1005 = vpop.permute.xlu0 %1004
      %1007 = vset.pattern.permute.xlu0 3
      %1008 = vperm.xlu0 %1007, %v328
      %v1009 = vpop.permute.xlu0 %1008
      %1011 = vset.pattern.permute.xlu0 3
      %1012 = vperm.xlu0 %1011, %v329
      %v1013 = vpop.permute.xlu0 %1012
      %1015 = vset.pattern.permute.xlu0 3
      %1016 = vperm.xlu0 %1015, %v330
      %v1017 = vpop.permute.xlu0 %1016
      %1019 = vset.pattern.permute.xlu0 3
      %1020 = vperm.xlu0 %1019, %v331
      %v1021 = vpop.permute.xlu0 %1020
      %1023 = vset.pattern.permute.xlu0 3
      %1024 = vperm.xlu0 %1023, %v332
      %v1025 = vpop.permute.xlu0 %1024
      %1027 = vset.pattern.permute.xlu0 3
      %1028 = vperm.xlu0 %1027, %v333
      %v1029 = vpop.permute.xlu0 %1028
      %1031 = vset.pattern.permute.xlu0 3
      %1032 = vperm.xlu0 %1031, %v334
      %v1033 = vpop.permute.xlu0 %1032
      %1035 = vset.pattern.permute.xlu0 3
      %1036 = vperm.xlu0 %1035, %v335
      %v1037 = vpop.permute.xlu0 %1036
      %1039 = vset.pattern.permute.xlu0 3
      %1040 = vperm.xlu0 %1039, %v336
      %v1041 = vpop.permute.xlu0 %1040
      %v1043 = vlaneseq
      %v1044 = vshrl.u32 %v1043, 7
      %v1045 = vsub.s32 0, %v1044
      %v1046 = vrot.slane %v922, %v1045
      %v1047 = vmul.f32 %v925, %v1046
      %v1048 = vmul.f32 %v929, %v1046
      %v1049 = vmul.f32 %v933, %v1046
      %v1050 = vmul.f32 %v937, %v1046
      %v1051 = vmul.f32 %v941, %v1046
      %v1052 = vmul.f32 %v945, %v1046
      %v1053 = vmul.f32 %v949, %v1046
      %v1054 = vmul.f32 %v953, %v1046
      %v1055 = vmul.f32 %v957, %v1046
      %v1056 = vmul.f32 %v961, %v1046
      %v1057 = vmul.f32 %v965, %v1046
      %v1058 = vmul.f32 %v969, %v1046
      %v1059 = vmul.f32 %v973, %v1046
      %v1060 = vmul.f32 %v977, %v1046
      %v1061 = vmul.f32 %v981, %v1046
      %v1062 = vmul.f32 %v985, %v1046
      %v1063 = vmul.f32 %v989, %v1046
      %v1064 = vmul.f32 %v993, %v1046
      %v1065 = vmul.f32 %v997, %v1046
      %v1066 = vmul.f32 %v1001, %v1046
      %v1067 = vmul.f32 %v1005, %v1046
      %v1068 = vmul.f32 %v1009, %v1046
      %v1069 = vmul.f32 %v1013, %v1046
      %v1070 = vmul.f32 %v1017, %v1046
      %v1071 = vmul.f32 %v1021, %v1046
      %v1072 = vmul.f32 %v1025, %v1046
      %v1073 = vmul.f32 %v1029, %v1046
      %v1074 = vmul.f32 %v1033, %v1046
      %v1075 = vmul.f32 %v1037, %v1046
      %v1076 = vmul.f32 %v1041, %v1046
      %v1077 = vadd.f32 %v892, %v1047
      %v1078 = vadd.f32 %v893, %v1048
      %v1079 = vadd.f32 %v894, %v1049
      %v1080 = vadd.f32 %v895, %v1050
      %v1081 = vadd.f32 %v896, %v1051
      %v1082 = vadd.f32 %v897, %v1052
      %v1083 = vadd.f32 %v898, %v1053
      %v1084 = vadd.f32 %v899, %v1054
      %v1085 = vadd.f32 %v900, %v1055
      %v1086 = vadd.f32 %v901, %v1056
      %v1087 = vadd.f32 %v902, %v1057
      %v1088 = vadd.f32 %v903, %v1058
      %v1089 = vadd.f32 %v904, %v1059
      %v1090 = vadd.f32 %v905, %v1060
      %v1091 = vadd.f32 %v906, %v1061
      %v1092 = vadd.f32 %v907, %v1062
      %v1093 = vadd.f32 %v908, %v1063
      %v1094 = vadd.f32 %v909, %v1064
      %v1095 = vadd.f32 %v910, %v1065
      %v1096 = vadd.f32 %v911, %v1066
      %v1097 = vadd.f32 %v912, %v1067
      %v1098 = vadd.f32 %v913, %v1068
      %v1099 = vadd.f32 %v914, %v1069
      %v1100 = vadd.f32 %v915, %v1070
      %v1101 = vadd.f32 %v916, %v1071
      %v1102 = vadd.f32 %v917, %v1072
      %v1103 = vadd.f32 %v918, %v1073
      %v1104 = vadd.f32 %v919, %v1074
      %v1105 = vadd.f32 %v920, %v1075
      %v1106 = vadd.f32 %v921, %v1076
      %v1107 = vld [vmem:[%s2] sm:$0x1]
      %v1109 = vlaneseq
      %v1110 = vshrl.u32 %v1109, 7
      %v1111 = vsub.s32 0, %v1110
      %v1112 = vrot.slane %v1107, %v1111
      %v1114 = vadd.f32 %v1077, %v1112
      %v1115 = vadd.f32 %v1078, %v1112
      %v1116 = vadd.f32 %v1079, %v1112
      %v1117 = vadd.f32 %v1080, %v1112
      %v1118 = vadd.f32 %v1081, %v1112
      %v1119 = vadd.f32 %v1082, %v1112
      %v1120 = vadd.f32 %v1083, %v1112
      %v1121 = vadd.f32 %v1084, %v1112
      %v1122 = vadd.f32 %v1085, %v1112
      %v1123 = vadd.f32 %v1086, %v1112
      %v1124 = vadd.f32 %v1087, %v1112
      %v1125 = vadd.f32 %v1088, %v1112
      %v1126 = vadd.f32 %v1089, %v1112
      %v1127 = vadd.f32 %v1090, %v1112
      %v1128 = vadd.f32 %v1091, %v1112
      %v1129 = vadd.f32 %v1092, %v1112
      %v1130 = vadd.f32 %v1093, %v1112
      %v1131 = vadd.f32 %v1094, %v1112
      %v1132 = vadd.f32 %v1095, %v1112
      %v1133 = vadd.f32 %v1096, %v1112
      %v1134 = vadd.f32 %v1097, %v1112
      %v1135 = vadd.f32 %v1098, %v1112
      %v1136 = vadd.f32 %v1099, %v1112
      %v1137 = vadd.f32 %v1100, %v1112
      %v1138 = vadd.f32 %v1101, %v1112
      %v1139 = vadd.f32 %v1102, %v1112
      %v1140 = vadd.f32 %v1103, %v1112
      %v1141 = vadd.f32 %v1104, %v1112
      %v1142 = vadd.f32 %v1105, %v1112
      %v1143 = vadd.f32 %v1106, %v1112
      %v1144 = vmax.f32 %v1114, 0.0
      %v1145 = vmax.f32 %v1115, 0.0
      %v1146 = vmax.f32 %v1116, 0.0
      %v1147 = vmax.f32 %v1117, 0.0
      %v1148 = vmax.f32 %v1118, 0.0
      %v1149 = vmax.f32 %v1119, 0.0
      %v1150 = vmax.f32 %v1120, 0.0
      %v1151 = vmax.f32 %v1121, 0.0
      %v1152 = vmax.f32 %v1122, 0.0
      %v1153 = vmax.f32 %v1123, 0.0
      %v1154 = vmax.f32 %v1124, 0.0
      %v1155 = vmax.f32 %v1125, 0.0
      %v1156 = vmax.f32 %v1126, 0.0
      %v1157 = vmax.f32 %v1127, 0.0
      %v1158 = vmax.f32 %v1128, 0.0
      %v1159 = vmax.f32 %v1129, 0.0
      %v1160 = vmax.f32 %v1130, 0.0
      %v1161 = vmax.f32 %v1131, 0.0
      %v1162 = vmax.f32 %v1132, 0.0
      %v1163 = vmax.f32 %v1133, 0.0
      %v1164 = vmax.f32 %v1134, 0.0
      %v1165 = vmax.f32 %v1135, 0.0
      %v1166 = vmax.f32 %v1136, 0.0
      %v1167 = vmax.f32 %v1137, 0.0
      %v1168 = vmax.f32 %v1138, 0.0
      %v1169 = vmax.f32 %v1139, 0.0
      %v1170 = vmax.f32 %v1140, 0.0
      %v1171 = vmax.f32 %v1141, 0.0
      %v1172 = vmax.f32 %v1142, 0.0
      %v1173 = vmax.f32 %v1143, 0.0
      %vm1174 = vcmask 195584
      %1175 = vst.msk [vmem:[#allocation2] sm:$0xff] %vm1174, %v1144
      %1176 = vst.msk [vmem:[#allocation2 + $0x8] sm:$0xff] %vm1174, %v1145
      %vm1177 = vcmask 189440
      %1178 = vst.msk [vmem:[#allocation2 + $0x10] sm:$0x3] %vm1177, %v1146
      %1179 = vst.msk [vmem:[#allocation2 + $0x18] sm:$0xff] %vm1174, %v1147
      %1180 = vst.msk [vmem:[#allocation2 + $0x20] sm:$0xff] %vm1174, %v1148
      %1181 = vst.msk [vmem:[#allocation2 + $0x28] sm:$0x3] %vm1177, %v1149
      %1182 = vst.msk [vmem:[#allocation2 + $0x30] sm:$0xff] %vm1174, %v1150
      %1183 = vst.msk [vmem:[#allocation2 + $0x38] sm:$0xff] %vm1174, %v1151
      %1184 = vst.msk [vmem:[#allocation2 + $0x40] sm:$0x3] %vm1177, %v1152
      %1185 = vst.msk [vmem:[#allocation2 + $0x48] sm:$0xff] %vm1174, %v1153
      %1186 = vst.msk [vmem:[#allocation2 + $0x50] sm:$0xff] %vm1174, %v1154
      %1187 = vst.msk [vmem:[#allocation2 + $0x58] sm:$0x3] %vm1177, %v1155
      %1188 = vst.msk [vmem:[#allocation2 + $0x60] sm:$0xff] %vm1174, %v1156
      %1189 = vst.msk [vmem:[#allocation2 + $0x68] sm:$0xff] %vm1174, %v1157
      %1190 = vst.msk [vmem:[#allocation2 + $0x70] sm:$0x3] %vm1177, %v1158
      %1191 = vst.msk [vmem:[#allocation2 + $0x78] sm:$0xff] %vm1174, %v1159
      %1192 = vst.msk [vmem:[#allocation2 + $0x80] sm:$0xff] %vm1174, %v1160
      %1193 = vst.msk [vmem:[#allocation2 + $0x88] sm:$0x3] %vm1177, %v1161
      %1194 = vst.msk [vmem:[#allocation2 + $0x90] sm:$0xff] %vm1174, %v1162
      %1195 = vst.msk [vmem:[#allocation2 + $0x98] sm:$0xff] %vm1174, %v1163
      %1196 = vst.msk [vmem:[#allocation2 + $0xa0] sm:$0x3] %vm1177, %v1164
      %1197 = vst.msk [vmem:[#allocation2 + $0xa8] sm:$0xff] %vm1174, %v1165
      %1198 = vst.msk [vmem:[#allocation2 + $0xb0] sm:$0xff] %vm1174, %v1166
      %1199 = vst.msk [vmem:[#allocation2 + $0xb8] sm:$0x3] %vm1177, %v1167
      %1200 = vst.msk [vmem:[#allocation2 + $0xc0] sm:$0xff] %vm1174, %v1168
      %1201 = vst.msk [vmem:[#allocation2 + $0xc8] sm:$0xff] %vm1174, %v1169
      %1202 = vst.msk [vmem:[#allocation2 + $0xd0] sm:$0x3] %vm1177, %v1170
      %1203 = vst.msk [vmem:[#allocation2 + $0xd8] sm:$0xff] %vm1174, %v1171
      %1204 = vst.msk [vmem:[#allocation2 + $0xe0] sm:$0xff] %vm1174, %v1172
      %1205 = vst.msk [vmem:[#allocation2 + $0xe8] sm:$0x3] %vm1177, %v1173
      %vm1206 = vcmask 188416
      %1207 = vst.msk [vmem:[#allocation2] sm:$0x1] %vm1206, 0.0
      %1208 = vst.msk [vmem:[#allocation2 + $0x18] sm:$0x1] %vm1206, 0.0
      %1209 = vst.msk [vmem:[#allocation2 + $0x30] sm:$0x1] %vm1206, 0.0
      %1210 = vst.msk [vmem:[#allocation2 + $0x48] sm:$0x1] %vm1206, 0.0
      %1211 = vst.msk [vmem:[#allocation2 + $0x60] sm:$0x1] %vm1206, 0.0
      %1212 = vst.msk [vmem:[#allocation2 + $0x78] sm:$0x1] %vm1206, 0.0
      %1213 = vst.msk [vmem:[#allocation2 + $0x90] sm:$0x1] %vm1206, 0.0
      %1214 = vst.msk [vmem:[#allocation2 + $0xa8] sm:$0x1] %vm1206, 0.0
      %1215 = vst.msk [vmem:[#allocation2 + $0xc0] sm:$0x1] %vm1206, 0.0
      %1216 = vst.msk [vmem:[#allocation2 + $0xd8] sm:$0x1] %vm1206, 0.0
      %1217 = vst.msk [vmem:[#allocation2 + $0x11] sm:$0x1] %vm1206, 0.0
      %1218 = vst.msk [vmem:[#allocation2 + $0x29] sm:$0x1] %vm1206, 0.0
      %1219 = vst.msk [vmem:[#allocation2 + $0x41] sm:$0x1] %vm1206, 0.0
      %1220 = vst.msk [vmem:[#allocation2 + $0x59] sm:$0x1] %vm1206, 0.0
      %1221 = vst.msk [vmem:[#allocation2 + $0x71] sm:$0x1] %vm1206, 0.0
      %1222 = vst.msk [vmem:[#allocation2 + $0x89] sm:$0x1] %vm1206, 0.0
      %1223 = vst.msk [vmem:[#allocation2 + $0xa1] sm:$0x1] %vm1206, 0.0
      %1224 = vst.msk [vmem:[#allocation2 + $0xb9] sm:$0x1] %vm1206, 0.0
      %1225 = vst.msk [vmem:[#allocation2 + $0xd1] sm:$0x1] %vm1206, 0.0
      %1226 = vst.msk [vmem:[#allocation2 + $0xe9] sm:$0x1] %vm1206, 0.0
      %p1227 = scmp.eq.s32.totalorder %s23, 0
      // Predicated region
      $region49: #{tpu_custom_call.1} parent=47 // pred_check
        %p1228 = pneg %p1227
      $region50: #{tpu_custom_call.1} parent=47 // pred_check_branch
        %1230 = sbr.rel (%p1228) target = $region52
      $region51: #{tpu_custom_call.1} parent=47 // pred_region
        %1231 = vst.msk [vmem:[#allocation2] sm:$0xff] %vm1174, 0.0
        %1232 = vst.msk [vmem:[#allocation2 + $0x8] sm:$0xff] %vm1174, 0.0
        %1233 = vst.msk [vmem:[#allocation2 + $0x10] sm:$0x3] %vm1177, 0.0
      $region52: #{tpu_custom_call.1} parent=47 // pred_fallthru
        _
      %p1234 = scmp.eq.s32.totalorder %s23, 1
      // Predicated region
      $region53: #{tpu_custom_call.1} parent=47 // pred_check
        %p1235 = pneg %p1234
      $region54: #{tpu_custom_call.1} parent=47 // pred_check_branch
        %1237 = sbr.rel (%p1235) target = $region56
      $region55: #{tpu_custom_call.1} parent=47 // pred_region
        %s1238 = scalar_lea.vmem [#allocation2], 216
        %1239 = vst.msk [vmem:[%s1238] sm:$0xff] %vm1174, 0.0
        %1240 = vst.msk [vmem:[%s1238 + $0x8] sm:$0xff] %vm1174, 0.0
        %1241 = vst.msk [vmem:[%s1238 + $0x10] sm:$0x3] %vm1177, 0.0
      $region56: #{tpu_custom_call.1} parent=47 // pred_fallthru
        _
      %v1242 = vld [vmem:[#allocation2] sm:$0xff]
      %v1243 = vld [vmem:[#allocation2 + $0x8] sm:$0xff]
      %v1244 = vld [vmem:[#allocation2 + $0x10] sm:$0x3]
      %v1245 = vld [vmem:[#allocation2 + $0x18] sm:$0xff]
      %v1246 = vld [vmem:[#allocation2 + $0x20] sm:$0xff]
      %v1247 = vld [vmem:[#allocation2 + $0x28] sm:$0x3]
      %v1248 = vld [vmem:[#allocation2 + $0x30] sm:$0xff]
      %v1249 = vld [vmem:[#allocation2 + $0x38] sm:$0xff]
      %v1250 = vld [vmem:[#allocation2 + $0x40] sm:$0x3]
      %v1251 = vld [vmem:[#allocation2 + $0x48] sm:$0xff]
      %v1252 = vld [vmem:[#allocation2 + $0x50] sm:$0xff]
      %v1253 = vld [vmem:[#allocation2 + $0x58] sm:$0x3]
      %v1254 = vld [vmem:[#allocation2 + $0x60] sm:$0xff]
      %v1255 = vld [vmem:[#allocation2 + $0x68] sm:$0xff]
      %v1256 = vld [vmem:[#allocation2 + $0x70] sm:$0x3]
      %v1257 = vld [vmem:[#allocation2 + $0x78] sm:$0xff]
      %v1258 = vld [vmem:[#allocation2 + $0x80] sm:$0xff]
      %v1259 = vld [vmem:[#allocation2 + $0x88] sm:$0x3]
      %v1260 = vld [vmem:[#allocation2 + $0x90] sm:$0xff]
      %v1261 = vld [vmem:[#allocation2 + $0x98] sm:$0xff]
      %v1262 = vld [vmem:[#allocation2 + $0xa0] sm:$0x3]
      %v1263 = vld [vmem:[#allocation2 + $0xa8] sm:$0xff]
      %v1264 = vld [vmem:[#allocation2 + $0xb0] sm:$0xff]
      %v1265 = vld [vmem:[#allocation2 + $0xb8] sm:$0x3]
      %s1266 = scalar_lea.vmem [#allocation2], 24
      %v1267 = vld [vmem:[%s1266] sm:$0xff]
      %v1268 = vld [vmem:[%s1266 + $0x8] sm:$0xff]
      %v1269 = vld [vmem:[%s1266 + $0x10] sm:$0x3]
      %v1270 = vld [vmem:[%s1266 + $0x18] sm:$0xff]
      %v1271 = vld [vmem:[%s1266 + $0x20] sm:$0xff]
      %v1272 = vld [vmem:[%s1266 + $0x28] sm:$0x3]
      %v1273 = vld [vmem:[%s1266 + $0x30] sm:$0xff]
      %v1274 = vld [vmem:[%s1266 + $0x38] sm:$0xff]
      %v1275 = vld [vmem:[%s1266 + $0x40] sm:$0x3]
      %v1276 = vld [vmem:[%s1266 + $0x48] sm:$0xff]
      %v1277 = vld [vmem:[%s1266 + $0x50] sm:$0xff]
      %v1278 = vld [vmem:[%s1266 + $0x58] sm:$0x3]
      %v1279 = vld [vmem:[%s1266 + $0x60] sm:$0xff]
      %v1280 = vld [vmem:[%s1266 + $0x68] sm:$0xff]
      %v1281 = vld [vmem:[%s1266 + $0x70] sm:$0x3]
      %v1282 = vld [vmem:[%s1266 + $0x78] sm:$0xff]
      %v1283 = vld [vmem:[%s1266 + $0x80] sm:$0xff]
      %v1284 = vld [vmem:[%s1266 + $0x88] sm:$0x3]
      %v1285 = vld [vmem:[%s1266 + $0x90] sm:$0xff]
      %v1286 = vld [vmem:[%s1266 + $0x98] sm:$0xff]
      %v1287 = vld [vmem:[%s1266 + $0xa0] sm:$0x3]
      %v1288 = vld [vmem:[%s1266 + $0xa8] sm:$0xff]
      %v1289 = vld [vmem:[%s1266 + $0xb0] sm:$0xff]
      %v1290 = vld [vmem:[%s1266 + $0xb8] sm:$0x3]
      %s1291 = scalar_lea.vmem [#allocation2], 48
      %v1292 = vld [vmem:[%s1291] sm:$0xff]
      %v1293 = vld [vmem:[%s1291 + $0x8] sm:$0xff]
      %v1294 = vld [vmem:[%s1291 + $0x10] sm:$0x3]
      %v1295 = vld [vmem:[%s1291 + $0x18] sm:$0xff]
      %v1296 = vld [vmem:[%s1291 + $0x20] sm:$0xff]
      %v1297 = vld [vmem:[%s1291 + $0x28] sm:$0x3]
      %v1298 = vld [vmem:[%s1291 + $0x30] sm:$0xff]
      %v1299 = vld [vmem:[%s1291 + $0x38] sm:$0xff]
      %v1300 = vld [vmem:[%s1291 + $0x40] sm:$0x3]
      %v1301 = vld [vmem:[%s1291 + $0x48] sm:$0xff]
      %v1302 = vld [vmem:[%s1291 + $0x50] sm:$0xff]
      %v1303 = vld [vmem:[%s1291 + $0x58] sm:$0x3]
      %v1304 = vld [vmem:[%s1291 + $0x60] sm:$0xff]
      %v1305 = vld [vmem:[%s1291 + $0x68] sm:$0xff]
      %v1306 = vld [vmem:[%s1291 + $0x70] sm:$0x3]
      %v1307 = vld [vmem:[%s1291 + $0x78] sm:$0xff]
      %v1308 = vld [vmem:[%s1291 + $0x80] sm:$0xff]
      %v1309 = vld [vmem:[%s1291 + $0x88] sm:$0x3]
      %v1310 = vld [vmem:[%s1291 + $0x90] sm:$0xff]
      %v1311 = vld [vmem:[%s1291 + $0x98] sm:$0xff]
      %v1312 = vld [vmem:[%s1291 + $0xa0] sm:$0x3]
      %v1313 = vld [vmem:[%s1291 + $0xa8] sm:$0xff]
      %v1314 = vld [vmem:[%s1291 + $0xb0] sm:$0xff]
      %v1315 = vld [vmem:[%s1291 + $0xb8] sm:$0x3]
      %v1316 = vld [vmem:[%s3] sm:$0x1]
      %v1317 = vlaneseq
      %v1318 = vshrl.u32 %v1317, 7
      %v1319 = vsub.s32 0, %v1318
      %v1320 = vrot.slane %v1316, %v1319
      %v1321 = vmul.f32 %v1242, %v1320
      %v1322 = vmul.f32 %v1243, %v1320
      %v1323 = vmul.f32 %v1245, %v1320
      %v1324 = vmul.f32 %v1246, %v1320
      %v1325 = vmul.f32 %v1248, %v1320
      %v1326 = vmul.f32 %v1249, %v1320
      %v1327 = vmul.f32 %v1251, %v1320
      %v1328 = vmul.f32 %v1252, %v1320
      %v1329 = vmul.f32 %v1254, %v1320
      %v1330 = vmul.f32 %v1255, %v1320
      %v1331 = vmul.f32 %v1257, %v1320
      %v1332 = vmul.f32 %v1258, %v1320
      %v1333 = vmul.f32 %v1260, %v1320
      %v1334 = vmul.f32 %v1261, %v1320
      %v1335 = vmul.f32 %v1263, %v1320
      %v1336 = vmul.f32 %v1264, %v1320
      %v1337 = vadd.f32 %v1321, 0.0
      %v1338 = vadd.f32 %v1322, 0.0
      %v1339 = vadd.f32 %v1323, 0.0
      %v1340 = vadd.f32 %v1324, 0.0
      %v1341 = vadd.f32 %v1325, 0.0
      %v1342 = vadd.f32 %v1326, 0.0
      %v1343 = vadd.f32 %v1327, 0.0
      %v1344 = vadd.f32 %v1328, 0.0
      %v1345 = vadd.f32 %v1329, 0.0
      %v1346 = vadd.f32 %v1330, 0.0
      %v1347 = vadd.f32 %v1331, 0.0
      %v1348 = vadd.f32 %v1332, 0.0
      %v1349 = vadd.f32 %v1333, 0.0
      %v1350 = vadd.f32 %v1334, 0.0
      %v1351 = vadd.f32 %v1335, 0.0
      %v1352 = vadd.f32 %v1336, 0.0
      %v1353 = vld [vmem:[%s3 + $0x1] sm:$0x1]
      %v1354 = vlaneseq
      %v1355 = vshrl.u32 %v1354, 7
      %v1356 = vsub.s32 0, %v1355
      %v1357 = vrot.slane %v1353, %v1356
      %v1358 = vmul.f32 %v1242, %v1357
      %v1359 = vmul.f32 %v1243, %v1357
      %v1360 = vmul.f32 %v1244, %v1357
      %v1361 = vmul.f32 %v1245, %v1357
      %v1362 = vmul.f32 %v1246, %v1357
      %v1363 = vmul.f32 %v1247, %v1357
      %v1364 = vmul.f32 %v1248, %v1357
      %v1365 = vmul.f32 %v1249, %v1357
      %v1366 = vmul.f32 %v1250, %v1357
      %v1367 = vmul.f32 %v1251, %v1357
      %v1368 = vmul.f32 %v1252, %v1357
      %v1369 = vmul.f32 %v1253, %v1357
      %v1370 = vmul.f32 %v1254, %v1357
      %v1371 = vmul.f32 %v1255, %v1357
      %v1372 = vmul.f32 %v1256, %v1357
      %v1373 = vmul.f32 %v1257, %v1357
      %v1374 = vmul.f32 %v1258, %v1357
      %v1375 = vmul.f32 %v1259, %v1357
      %v1376 = vmul.f32 %v1260, %v1357
      %v1377 = vmul.f32 %v1261, %v1357
      %v1378 = vmul.f32 %v1262, %v1357
      %v1379 = vmul.f32 %v1263, %v1357
      %v1380 = vmul.f32 %v1264, %v1357
      %v1381 = vmul.f32 %v1265, %v1357
      %vm1406 = vcmask 1046528
      %v1407 = vrot.slane %v1358, 1
      %v1408 = vrot.slane %v1359, 1
      %v1409 = vsel %vm1406, %v1407, %v1408
      %v1410 = vrot.slane %v1360, 1
      %v1411 = vsel %vm1406, %v1408, %v1410
      %v1412 = vrot.slane %v1361, 1
      %v1413 = vrot.slane %v1362, 1
      %v1414 = vsel %vm1406, %v1412, %v1413
      %v1415 = vrot.slane %v1363, 1
      %v1416 = vsel %vm1406, %v1413, %v1415
      %v1417 = vrot.slane %v1364, 1
      %v1418 = vrot.slane %v1365, 1
      %v1419 = vsel %vm1406, %v1417, %v1418
      %v1420 = vrot.slane %v1366, 1
      %v1421 = vsel %vm1406, %v1418, %v1420
      %v1422 = vrot.slane %v1367, 1
      %v1423 = vrot.slane %v1368, 1
      %v1424 = vsel %vm1406, %v1422, %v1423
      %v1425 = vrot.slane %v1369, 1
      %v1426 = vsel %vm1406, %v1423, %v1425
      %v1427 = vrot.slane %v1370, 1
      %v1428 = vrot.slane %v1371, 1
      %v1429 = vsel %vm1406, %v1427, %v1428
      %v1430 = vrot.slane %v1372, 1
      %v1431 = vsel %vm1406, %v1428, %v1430
      %v1432 = vrot.slane %v1373, 1
      %v1433 = vrot.slane %v1374, 1
      %v1434 = vsel %vm1406, %v1432, %v1433
      %v1435 = vrot.slane %v1375, 1
      %v1436 = vsel %vm1406, %v1433, %v1435
      %v1437 = vrot.slane %v1376, 1
      %v1438 = vrot.slane %v1377, 1
      %v1439 = vsel %vm1406, %v1437, %v1438
      %v1440 = vrot.slane %v1378, 1
      %v1441 = vsel %vm1406, %v1438, %v1440
      %v1442 = vrot.slane %v1379, 1
      %v1443 = vrot.slane %v1380, 1
      %v1444 = vsel %vm1406, %v1442, %v1443
      %v1445 = vrot.slane %v1381, 1
      %v1446 = vsel %vm1406, %v1443, %v1445
      %v1463 = vadd.f32 %v1337, %v1409
      %v1464 = vadd.f32 %v1338, %v1411
      %v1465 = vadd.f32 %v1339, %v1414
      %v1466 = vadd.f32 %v1340, %v1416
      %v1467 = vadd.f32 %v1341, %v1419
      %v1468 = vadd.f32 %v1342, %v1421
      %v1469 = vadd.f32 %v1343, %v1424
      %v1470 = vadd.f32 %v1344, %v1426
      %v1471 = vadd.f32 %v1345, %v1429
      %v1472 = vadd.f32 %v1346, %v1431
      %v1473 = vadd.f32 %v1347, %v1434
      %v1474 = vadd.f32 %v1348, %v1436
      %v1475 = vadd.f32 %v1349, %v1439
      %v1476 = vadd.f32 %v1350, %v1441
      %v1477 = vadd.f32 %v1351, %v1444
      %v1478 = vadd.f32 %v1352, %v1446
      %v1479 = vld [vmem:[%s3 + $0x2] sm:$0x1]
      %v1480 = vlaneseq
      %v1481 = vshrl.u32 %v1480, 7
      %v1482 = vsub.s32 0, %v1481
      %v1483 = vrot.slane %v1479, %v1482
      %v1484 = vmul.f32 %v1242, %v1483
      %v1485 = vmul.f32 %v1243, %v1483
      %v1486 = vmul.f32 %v1244, %v1483
      %v1487 = vmul.f32 %v1245, %v1483
      %v1488 = vmul.f32 %v1246, %v1483
      %v1489 = vmul.f32 %v1247, %v1483
      %v1490 = vmul.f32 %v1248, %v1483
      %v1491 = vmul.f32 %v1249, %v1483
      %v1492 = vmul.f32 %v1250, %v1483
      %v1493 = vmul.f32 %v1251, %v1483
      %v1494 = vmul.f32 %v1252, %v1483
      %v1495 = vmul.f32 %v1253, %v1483
      %v1496 = vmul.f32 %v1254, %v1483
      %v1497 = vmul.f32 %v1255, %v1483
      %v1498 = vmul.f32 %v1256, %v1483
      %v1499 = vmul.f32 %v1257, %v1483
      %v1500 = vmul.f32 %v1258, %v1483
      %v1501 = vmul.f32 %v1259, %v1483
      %v1502 = vmul.f32 %v1260, %v1483
      %v1503 = vmul.f32 %v1261, %v1483
      %v1504 = vmul.f32 %v1262, %v1483
      %v1505 = vmul.f32 %v1263, %v1483
      %v1506 = vmul.f32 %v1264, %v1483
      %v1507 = vmul.f32 %v1265, %v1483
      %vm1532 = vcmask 1045504
      %v1533 = vrot.slane %v1484, 2
      %v1534 = vrot.slane %v1485, 2
      %v1535 = vsel %vm1532, %v1533, %v1534
      %v1536 = vrot.slane %v1486, 2
      %v1537 = vsel %vm1532, %v1534, %v1536
      %v1538 = vrot.slane %v1487, 2
      %v1539 = vrot.slane %v1488, 2
      %v1540 = vsel %vm1532, %v1538, %v1539
      %v1541 = vrot.slane %v1489, 2
      %v1542 = vsel %vm1532, %v1539, %v1541
      %v1543 = vrot.slane %v1490, 2
      %v1544 = vrot.slane %v1491, 2
      %v1545 = vsel %vm1532, %v1543, %v1544
      %v1546 = vrot.slane %v1492, 2
      %v1547 = vsel %vm1532, %v1544, %v1546
      %v1548 = vrot.slane %v1493, 2
      %v1549 = vrot.slane %v1494, 2
      %v1550 = vsel %vm1532, %v1548, %v1549
      %v1551 = vrot.slane %v1495, 2
      %v1552 = vsel %vm1532, %v1549, %v1551
      %v1553 = vrot.slane %v1496, 2
      %v1554 = vrot.slane %v1497, 2
      %v1555 = vsel %vm1532, %v1553, %v1554
      %v1556 = vrot.slane %v1498, 2
      %v1557 = vsel %vm1532, %v1554, %v1556
      %v1558 = vrot.slane %v1499, 2
      %v1559 = vrot.slane %v1500, 2
      %v1560 = vsel %vm1532, %v1558, %v1559
      %v1561 = vrot.slane %v1501, 2
      %v1562 = vsel %vm1532, %v1559, %v1561
      %v1563 = vrot.slane %v1502, 2
      %v1564 = vrot.slane %v1503, 2
      %v1565 = vsel %vm1532, %v1563, %v1564
      %v1566 = vrot.slane %v1504, 2
      %v1567 = vsel %vm1532, %v1564, %v1566
      %v1568 = vrot.slane %v1505, 2
      %v1569 = vrot.slane %v1506, 2
      %v1570 = vsel %vm1532, %v1568, %v1569
      %v1571 = vrot.slane %v1507, 2
      %v1572 = vsel %vm1532, %v1569, %v1571
      %v1589 = vadd.f32 %v1463, %v1535
      %v1590 = vadd.f32 %v1464, %v1537
      %v1591 = vadd.f32 %v1465, %v1540
      %v1592 = vadd.f32 %v1466, %v1542
      %v1593 = vadd.f32 %v1467, %v1545
      %v1594 = vadd.f32 %v1468, %v1547
      %v1595 = vadd.f32 %v1469, %v1550
      %v1596 = vadd.f32 %v1470, %v1552
      %v1597 = vadd.f32 %v1471, %v1555
      %v1598 = vadd.f32 %v1472, %v1557
      %v1599 = vadd.f32 %v1473, %v1560
      %v1600 = vadd.f32 %v1474, %v1562
      %v1601 = vadd.f32 %v1475, %v1565
      %v1602 = vadd.f32 %v1476, %v1567
      %v1603 = vadd.f32 %v1477, %v1570
      %v1604 = vadd.f32 %v1478, %v1572
      %v1605 = vld [vmem:[%s3 + $0x3] sm:$0x1]
      %v1606 = vlaneseq
      %v1607 = vshrl.u32 %v1606, 7
      %v1608 = vsub.s32 0, %v1607
      %v1609 = vrot.slane %v1605, %v1608
      %v1610 = vmul.f32 %v1267, %v1609
      %v1611 = vmul.f32 %v1268, %v1609
      %v1612 = vmul.f32 %v1270, %v1609
      %v1613 = vmul.f32 %v1271, %v1609
      %v1614 = vmul.f32 %v1273, %v1609
      %v1615 = vmul.f32 %v1274, %v1609
      %v1616 = vmul.f32 %v1276, %v1609
      %v1617 = vmul.f32 %v1277, %v1609
      %v1618 = vmul.f32 %v1279, %v1609
      %v1619 = vmul.f32 %v1280, %v1609
      %v1620 = vmul.f32 %v1282, %v1609
      %v1621 = vmul.f32 %v1283, %v1609
      %v1622 = vmul.f32 %v1285, %v1609
      %v1623 = vmul.f32 %v1286, %v1609
      %v1624 = vmul.f32 %v1288, %v1609
      %v1625 = vmul.f32 %v1289, %v1609
      %v1626 = vadd.f32 %v1589, %v1610
      %v1627 = vadd.f32 %v1590, %v1611
      %v1628 = vadd.f32 %v1591, %v1612
      %v1629 = vadd.f32 %v1592, %v1613
      %v1630 = vadd.f32 %v1593, %v1614
      %v1631 = vadd.f32 %v1594, %v1615
      %v1632 = vadd.f32 %v1595, %v1616
      %v1633 = vadd.f32 %v1596, %v1617
      %v1634 = vadd.f32 %v1597, %v1618
      %v1635 = vadd.f32 %v1598, %v1619
      %v1636 = vadd.f32 %v1599, %v1620
      %v1637 = vadd.f32 %v1600, %v1621
      %v1638 = vadd.f32 %v1601, %v1622
      %v1639 = vadd.f32 %v1602, %v1623
      %v1640 = vadd.f32 %v1603, %v1624
      %v1641 = vadd.f32 %v1604, %v1625
      %v1642 = vld [vmem:[%s3 + $0x4] sm:$0x1]
      %v1643 = vlaneseq
      %v1644 = vshrl.u32 %v1643, 7
      %v1645 = vsub.s32 0, %v1644
      %v1646 = vrot.slane %v1642, %v1645
      %v1647 = vmul.f32 %v1267, %v1646
      %v1648 = vmul.f32 %v1268, %v1646
      %v1649 = vmul.f32 %v1269, %v1646
      %v1650 = vmul.f32 %v1270, %v1646
      %v1651 = vmul.f32 %v1271, %v1646
      %v1652 = vmul.f32 %v1272, %v1646
      %v1653 = vmul.f32 %v1273, %v1646
      %v1654 = vmul.f32 %v1274, %v1646
      %v1655 = vmul.f32 %v1275, %v1646
      %v1656 = vmul.f32 %v1276, %v1646
      %v1657 = vmul.f32 %v1277, %v1646
      %v1658 = vmul.f32 %v1278, %v1646
      %v1659 = vmul.f32 %v1279, %v1646
      %v1660 = vmul.f32 %v1280, %v1646
      %v1661 = vmul.f32 %v1281, %v1646
      %v1662 = vmul.f32 %v1282, %v1646
      %v1663 = vmul.f32 %v1283, %v1646
      %v1664 = vmul.f32 %v1284, %v1646
      %v1665 = vmul.f32 %v1285, %v1646
      %v1666 = vmul.f32 %v1286, %v1646
      %v1667 = vmul.f32 %v1287, %v1646
      %v1668 = vmul.f32 %v1288, %v1646
      %v1669 = vmul.f32 %v1289, %v1646
      %v1670 = vmul.f32 %v1290, %v1646
      %v1695 = vrot.slane %v1647, 1
      %v1696 = vrot.slane %v1648, 1
      %v1697 = vsel %vm1406, %v1695, %v1696
      %v1698 = vrot.slane %v1649, 1
      %v1699 = vsel %vm1406, %v1696, %v1698
      %v1700 = vrot.slane %v1650, 1
      %v1701 = vrot.slane %v1651, 1
      %v1702 = vsel %vm1406, %v1700, %v1701
      %v1703 = vrot.slane %v1652, 1
      %v1704 = vsel %vm1406, %v1701, %v1703
      %v1705 = vrot.slane %v1653, 1
      %v1706 = vrot.slane %v1654, 1
      %v1707 = vsel %vm1406, %v1705, %v1706
      %v1708 = vrot.slane %v1655, 1
      %v1709 = vsel %vm1406, %v1706, %v1708
      %v1710 = vrot.slane %v1656, 1
      %v1711 = vrot.slane %v1657, 1
      %v1712 = vsel %vm1406, %v1710, %v1711
      %v1713 = vrot.slane %v1658, 1
      %v1714 = vsel %vm1406, %v1711, %v1713
      %v1715 = vrot.slane %v1659, 1
      %v1716 = vrot.slane %v1660, 1
      %v1717 = vsel %vm1406, %v1715, %v1716
      %v1718 = vrot.slane %v1661, 1
      %v1719 = vsel %vm1406, %v1716, %v1718
      %v1720 = vrot.slane %v1662, 1
      %v1721 = vrot.slane %v1663, 1
      %v1722 = vsel %vm1406, %v1720, %v1721
      %v1723 = vrot.slane %v1664, 1
      %v1724 = vsel %vm1406, %v1721, %v1723
      %v1725 = vrot.slane %v1665, 1
      %v1726 = vrot.slane %v1666, 1
      %v1727 = vsel %vm1406, %v1725, %v1726
      %v1728 = vrot.slane %v1667, 1
      %v1729 = vsel %vm1406, %v1726, %v1728
      %v1730 = vrot.slane %v1668, 1
      %v1731 = vrot.slane %v1669, 1
      %v1732 = vsel %vm1406, %v1730, %v1731
      %v1733 = vrot.slane %v1670, 1
      %v1734 = vsel %vm1406, %v1731, %v1733
      %v1751 = vadd.f32 %v1626, %v1697
      %v1752 = vadd.f32 %v1627, %v1699
      %v1753 = vadd.f32 %v1628, %v1702
      %v1754 = vadd.f32 %v1629, %v1704
      %v1755 = vadd.f32 %v1630, %v1707
      %v1756 = vadd.f32 %v1631, %v1709
      %v1757 = vadd.f32 %v1632, %v1712
      %v1758 = vadd.f32 %v1633, %v1714
      %v1759 = vadd.f32 %v1634, %v1717
      %v1760 = vadd.f32 %v1635, %v1719
      %v1761 = vadd.f32 %v1636, %v1722
      %v1762 = vadd.f32 %v1637, %v1724
      %v1763 = vadd.f32 %v1638, %v1727
      %v1764 = vadd.f32 %v1639, %v1729
      %v1765 = vadd.f32 %v1640, %v1732
      %v1766 = vadd.f32 %v1641, %v1734
      %v1767 = vld [vmem:[%s3 + $0x5] sm:$0x1]
      %v1768 = vlaneseq
      %v1769 = vshrl.u32 %v1768, 7
      %v1770 = vsub.s32 0, %v1769
      %v1771 = vrot.slane %v1767, %v1770
      %v1772 = vmul.f32 %v1267, %v1771
      %v1773 = vmul.f32 %v1268, %v1771
      %v1774 = vmul.f32 %v1269, %v1771
      %v1775 = vmul.f32 %v1270, %v1771
      %v1776 = vmul.f32 %v1271, %v1771
      %v1777 = vmul.f32 %v1272, %v1771
      %v1778 = vmul.f32 %v1273, %v1771
      %v1779 = vmul.f32 %v1274, %v1771
      %v1780 = vmul.f32 %v1275, %v1771
      %v1781 = vmul.f32 %v1276, %v1771
      %v1782 = vmul.f32 %v1277, %v1771
      %v1783 = vmul.f32 %v1278, %v1771
      %v1784 = vmul.f32 %v1279, %v1771
      %v1785 = vmul.f32 %v1280, %v1771
      %v1786 = vmul.f32 %v1281, %v1771
      %v1787 = vmul.f32 %v1282, %v1771
      %v1788 = vmul.f32 %v1283, %v1771
      %v1789 = vmul.f32 %v1284, %v1771
      %v1790 = vmul.f32 %v1285, %v1771
      %v1791 = vmul.f32 %v1286, %v1771
      %v1792 = vmul.f32 %v1287, %v1771
      %v1793 = vmul.f32 %v1288, %v1771
      %v1794 = vmul.f32 %v1289, %v1771
      %v1795 = vmul.f32 %v1290, %v1771
      %v1820 = vrot.slane %v1772, 2
      %v1821 = vrot.slane %v1773, 2
      %v1822 = vsel %vm1532, %v1820, %v1821
      %v1823 = vrot.slane %v1774, 2
      %v1824 = vsel %vm1532, %v1821, %v1823
      %v1825 = vrot.slane %v1775, 2
      %v1826 = vrot.slane %v1776, 2
      %v1827 = vsel %vm1532, %v1825, %v1826
      %v1828 = vrot.slane %v1777, 2
      %v1829 = vsel %vm1532, %v1826, %v1828
      %v1830 = vrot.slane %v1778, 2
      %v1831 = vrot.slane %v1779, 2
      %v1832 = vsel %vm1532, %v1830, %v1831
      %v1833 = vrot.slane %v1780, 2
      %v1834 = vsel %vm1532, %v1831, %v1833
      %v1835 = vrot.slane %v1781, 2
      %v1836 = vrot.slane %v1782, 2
      %v1837 = vsel %vm1532, %v1835, %v1836
      %v1838 = vrot.slane %v1783, 2
      %v1839 = vsel %vm1532, %v1836, %v1838
      %v1840 = vrot.slane %v1784, 2
      %v1841 = vrot.slane %v1785, 2
      %v1842 = vsel %vm1532, %v1840, %v1841
      %v1843 = vrot.slane %v1786, 2
      %v1844 = vsel %vm1532, %v1841, %v1843
      %v1845 = vrot.slane %v1787, 2
      %v1846 = vrot.slane %v1788, 2
      %v1847 = vsel %vm1532, %v1845, %v1846
      %v1848 = vrot.slane %v1789, 2
      %v1849 = vsel %vm1532, %v1846, %v1848
      %v1850 = vrot.slane %v1790, 2
      %v1851 = vrot.slane %v1791, 2
      %v1852 = vsel %vm1532, %v1850, %v1851
      %v1853 = vrot.slane %v1792, 2
      %v1854 = vsel %vm1532, %v1851, %v1853
      %v1855 = vrot.slane %v1793, 2
      %v1856 = vrot.slane %v1794, 2
      %v1857 = vsel %vm1532, %v1855, %v1856
      %v1858 = vrot.slane %v1795, 2
      %v1859 = vsel %vm1532, %v1856, %v1858
      %v1876 = vadd.f32 %v1751, %v1822
      %v1877 = vadd.f32 %v1752, %v1824
      %v1878 = vadd.f32 %v1753, %v1827
      %v1879 = vadd.f32 %v1754, %v1829
      %v1880 = vadd.f32 %v1755, %v1832
      %v1881 = vadd.f32 %v1756, %v1834
      %v1882 = vadd.f32 %v1757, %v1837
      %v1883 = vadd.f32 %v1758, %v1839
      %v1884 = vadd.f32 %v1759, %v1842
      %v1885 = vadd.f32 %v1760, %v1844
      %v1886 = vadd.f32 %v1761, %v1847
      %v1887 = vadd.f32 %v1762, %v1849
      %v1888 = vadd.f32 %v1763, %v1852
      %v1889 = vadd.f32 %v1764, %v1854
      %v1890 = vadd.f32 %v1765, %v1857
      %v1891 = vadd.f32 %v1766, %v1859
      %v1892 = vld [vmem:[%s3 + $0x6] sm:$0x1]
      %v1893 = vlaneseq
      %v1894 = vshrl.u32 %v1893, 7
      %v1895 = vsub.s32 0, %v1894
      %v1896 = vrot.slane %v1892, %v1895
      %v1897 = vmul.f32 %v1292, %v1896
      %v1898 = vmul.f32 %v1293, %v1896
      %v1899 = vmul.f32 %v1295, %v1896
      %v1900 = vmul.f32 %v1296, %v1896
      %v1901 = vmul.f32 %v1298, %v1896
      %v1902 = vmul.f32 %v1299, %v1896
      %v1903 = vmul.f32 %v1301, %v1896
      %v1904 = vmul.f32 %v1302, %v1896
      %v1905 = vmul.f32 %v1304, %v1896
      %v1906 = vmul.f32 %v1305, %v1896
      %v1907 = vmul.f32 %v1307, %v1896
      %v1908 = vmul.f32 %v1308, %v1896
      %v1909 = vmul.f32 %v1310, %v1896
      %v1910 = vmul.f32 %v1311, %v1896
      %v1911 = vmul.f32 %v1313, %v1896
      %v1912 = vmul.f32 %v1314, %v1896
      %v1913 = vadd.f32 %v1876, %v1897
      %v1914 = vadd.f32 %v1877, %v1898
      %v1915 = vadd.f32 %v1878, %v1899
      %v1916 = vadd.f32 %v1879, %v1900
      %v1917 = vadd.f32 %v1880, %v1901
      %v1918 = vadd.f32 %v1881, %v1902
      %v1919 = vadd.f32 %v1882, %v1903
      %v1920 = vadd.f32 %v1883, %v1904
      %v1921 = vadd.f32 %v1884, %v1905
      %v1922 = vadd.f32 %v1885, %v1906
      %v1923 = vadd.f32 %v1886, %v1907
      %v1924 = vadd.f32 %v1887, %v1908
      %v1925 = vadd.f32 %v1888, %v1909
      %v1926 = vadd.f32 %v1889, %v1910
      %v1927 = vadd.f32 %v1890, %v1911
      %v1928 = vadd.f32 %v1891, %v1912
      %v1929 = vld [vmem:[%s3 + $0x7] sm:$0x1]
      %v1930 = vlaneseq
      %v1931 = vshrl.u32 %v1930, 7
      %v1932 = vsub.s32 0, %v1931
      %v1933 = vrot.slane %v1929, %v1932
      %v1934 = vmul.f32 %v1292, %v1933
      %v1935 = vmul.f32 %v1293, %v1933
      %v1936 = vmul.f32 %v1294, %v1933
      %v1937 = vmul.f32 %v1295, %v1933
      %v1938 = vmul.f32 %v1296, %v1933
      %v1939 = vmul.f32 %v1297, %v1933
      %v1940 = vmul.f32 %v1298, %v1933
      %v1941 = vmul.f32 %v1299, %v1933
      %v1942 = vmul.f32 %v1300, %v1933
      %v1943 = vmul.f32 %v1301, %v1933
      %v1944 = vmul.f32 %v1302, %v1933
      %v1945 = vmul.f32 %v1303, %v1933
      %v1946 = vmul.f32 %v1304, %v1933
      %v1947 = vmul.f32 %v1305, %v1933
      %v1948 = vmul.f32 %v1306, %v1933
      %v1949 = vmul.f32 %v1307, %v1933
      %v1950 = vmul.f32 %v1308, %v1933
      %v1951 = vmul.f32 %v1309, %v1933
      %v1952 = vmul.f32 %v1310, %v1933
      %v1953 = vmul.f32 %v1311, %v1933
      %v1954 = vmul.f32 %v1312, %v1933
      %v1955 = vmul.f32 %v1313, %v1933
      %v1956 = vmul.f32 %v1314, %v1933
      %v1957 = vmul.f32 %v1315, %v1933
      %v1982 = vrot.slane %v1934, 1
      %v1983 = vrot.slane %v1935, 1
      %v1984 = vsel %vm1406, %v1982, %v1983
      %v1985 = vrot.slane %v1936, 1
      %v1986 = vsel %vm1406, %v1983, %v1985
      %v1987 = vrot.slane %v1937, 1
      %v1988 = vrot.slane %v1938, 1
      %v1989 = vsel %vm1406, %v1987, %v1988
      %v1990 = vrot.slane %v1939, 1
      %v1991 = vsel %vm1406, %v1988, %v1990
      %v1992 = vrot.slane %v1940, 1
      %v1993 = vrot.slane %v1941, 1
      %v1994 = vsel %vm1406, %v1992, %v1993
      %v1995 = vrot.slane %v1942, 1
      %v1996 = vsel %vm1406, %v1993, %v1995
      %v1997 = vrot.slane %v1943, 1
      %v1998 = vrot.slane %v1944, 1
      %v1999 = vsel %vm1406, %v1997, %v1998
      %v2000 = vrot.slane %v1945, 1
      %v2001 = vsel %vm1406, %v1998, %v2000
      %v2002 = vrot.slane %v1946, 1
      %v2003 = vrot.slane %v1947, 1
      %v2004 = vsel %vm1406, %v2002, %v2003
      %v2005 = vrot.slane %v1948, 1
      %v2006 = vsel %vm1406, %v2003, %v2005
      %v2007 = vrot.slane %v1949, 1
      %v2008 = vrot.slane %v1950, 1
      %v2009 = vsel %vm1406, %v2007, %v2008
      %v2010 = vrot.slane %v1951, 1
      %v2011 = vsel %vm1406, %v2008, %v2010
      %v2012 = vrot.slane %v1952, 1
      %v2013 = vrot.slane %v1953, 1
      %v2014 = vsel %vm1406, %v2012, %v2013
      %v2015 = vrot.slane %v1954, 1
      %v2016 = vsel %vm1406, %v2013, %v2015
      %v2017 = vrot.slane %v1955, 1
      %v2018 = vrot.slane %v1956, 1
      %v2019 = vsel %vm1406, %v2017, %v2018
      %v2020 = vrot.slane %v1957, 1
      %v2021 = vsel %vm1406, %v2018, %v2020
      %v2038 = vadd.f32 %v1913, %v1984
      %v2039 = vadd.f32 %v1914, %v1986
      %v2040 = vadd.f32 %v1915, %v1989
      %v2041 = vadd.f32 %v1916, %v1991
      %v2042 = vadd.f32 %v1917, %v1994
      %v2043 = vadd.f32 %v1918, %v1996
      %v2044 = vadd.f32 %v1919, %v1999
      %v2045 = vadd.f32 %v1920, %v2001
      %v2046 = vadd.f32 %v1921, %v2004
      %v2047 = vadd.f32 %v1922, %v2006
      %v2048 = vadd.f32 %v1923, %v2009
      %v2049 = vadd.f32 %v1924, %v2011
      %v2050 = vadd.f32 %v1925, %v2014
      %v2051 = vadd.f32 %v1926, %v2016
      %v2052 = vadd.f32 %v1927, %v2019
      %v2053 = vadd.f32 %v1928, %v2021
      %v2054 = vld [vmem:[%s3 + $0x8] sm:$0x1]
      %v2055 = vlaneseq
      %v2056 = vshrl.u32 %v2055, 7
      %v2057 = vsub.s32 0, %v2056
      %v2058 = vrot.slane %v2054, %v2057
      %v2059 = vmul.f32 %v1292, %v2058
      %v2060 = vmul.f32 %v1293, %v2058
      %v2061 = vmul.f32 %v1294, %v2058
      %v2062 = vmul.f32 %v1295, %v2058
      %v2063 = vmul.f32 %v1296, %v2058
      %v2064 = vmul.f32 %v1297, %v2058
      %v2065 = vmul.f32 %v1298, %v2058
      %v2066 = vmul.f32 %v1299, %v2058
      %v2067 = vmul.f32 %v1300, %v2058
      %v2068 = vmul.f32 %v1301, %v2058
      %v2069 = vmul.f32 %v1302, %v2058
      %v2070 = vmul.f32 %v1303, %v2058
      %v2071 = vmul.f32 %v1304, %v2058
      %v2072 = vmul.f32 %v1305, %v2058
      %v2073 = vmul.f32 %v1306, %v2058
      %v2074 = vmul.f32 %v1307, %v2058
      %v2075 = vmul.f32 %v1308, %v2058
      %v2076 = vmul.f32 %v1309, %v2058
      %v2077 = vmul.f32 %v1310, %v2058
      %v2078 = vmul.f32 %v1311, %v2058
      %v2079 = vmul.f32 %v1312, %v2058
      %v2080 = vmul.f32 %v1313, %v2058
      %v2081 = vmul.f32 %v1314, %v2058
      %v2082 = vmul.f32 %v1315, %v2058
      %v2107 = vrot.slane %v2059, 2
      %v2108 = vrot.slane %v2060, 2
      %v2109 = vsel %vm1532, %v2107, %v2108
      %v2110 = vrot.slane %v2061, 2
      %v2111 = vsel %vm1532, %v2108, %v2110
      %v2112 = vrot.slane %v2062, 2
      %v2113 = vrot.slane %v2063, 2
      %v2114 = vsel %vm1532, %v2112, %v2113
      %v2115 = vrot.slane %v2064, 2
      %v2116 = vsel %vm1532, %v2113, %v2115
      %v2117 = vrot.slane %v2065, 2
      %v2118 = vrot.slane %v2066, 2
      %v2119 = vsel %vm1532, %v2117, %v2118
      %v2120 = vrot.slane %v2067, 2
      %v2121 = vsel %vm1532, %v2118, %v2120
      %v2122 = vrot.slane %v2068, 2
      %v2123 = vrot.slane %v2069, 2
      %v2124 = vsel %vm1532, %v2122, %v2123
      %v2125 = vrot.slane %v2070, 2
      %v2126 = vsel %vm1532, %v2123, %v2125
      %v2127 = vrot.slane %v2071, 2
      %v2128 = vrot.slane %v2072, 2
      %v2129 = vsel %vm1532, %v2127, %v2128
      %v2130 = vrot.slane %v2073, 2
      %v2131 = vsel %vm1532, %v2128, %v2130
      %v2132 = vrot.slane %v2074, 2
      %v2133 = vrot.slane %v2075, 2
      %v2134 = vsel %vm1532, %v2132, %v2133
      %v2135 = vrot.slane %v2076, 2
      %v2136 = vsel %vm1532, %v2133, %v2135
      %v2137 = vrot.slane %v2077, 2
      %v2138 = vrot.slane %v2078, 2
      %v2139 = vsel %vm1532, %v2137, %v2138
      %v2140 = vrot.slane %v2079, 2
      %v2141 = vsel %vm1532, %v2138, %v2140
      %v2142 = vrot.slane %v2080, 2
      %v2143 = vrot.slane %v2081, 2
      %v2144 = vsel %vm1532, %v2142, %v2143
      %v2145 = vrot.slane %v2082, 2
      %v2146 = vsel %vm1532, %v2143, %v2145
      %v2163 = vadd.f32 %v2038, %v2109
      %v2164 = vadd.f32 %v2039, %v2111
      %v2165 = vadd.f32 %v2040, %v2114
      %v2166 = vadd.f32 %v2041, %v2116
      %v2167 = vadd.f32 %v2042, %v2119
      %v2168 = vadd.f32 %v2043, %v2121
      %v2169 = vadd.f32 %v2044, %v2124
      %v2170 = vadd.f32 %v2045, %v2126
      %v2171 = vadd.f32 %v2046, %v2129
      %v2172 = vadd.f32 %v2047, %v2131
      %v2173 = vadd.f32 %v2048, %v2134
      %v2174 = vadd.f32 %v2049, %v2136
      %v2175 = vadd.f32 %v2050, %v2139
      %v2176 = vadd.f32 %v2051, %v2141
      %v2177 = vadd.f32 %v2052, %v2144
      %v2178 = vadd.f32 %v2053, %v2146
      %v2179 = vld [vmem:[%s4] sm:$0x1]
      %v2181 = vlaneseq
      %v2182 = vshrl.u32 %v2181, 7
      %v2183 = vsub.s32 0, %v2182
      %v2184 = vrot.slane %v2179, %v2183
      %v2186 = vadd.f32 %v2163, %v2184
      %v2187 = vadd.f32 %v2164, %v2184
      %v2188 = vadd.f32 %v2165, %v2184
      %v2189 = vadd.f32 %v2166, %v2184
      %v2190 = vadd.f32 %v2167, %v2184
      %v2191 = vadd.f32 %v2168, %v2184
      %v2192 = vadd.f32 %v2169, %v2184
      %v2193 = vadd.f32 %v2170, %v2184
      %v2194 = vadd.f32 %v2171, %v2184
      %v2195 = vadd.f32 %v2172, %v2184
      %v2196 = vadd.f32 %v2173, %v2184
      %v2197 = vadd.f32 %v2174, %v2184
      %v2198 = vadd.f32 %v2175, %v2184
      %v2199 = vadd.f32 %v2176, %v2184
      %v2200 = vadd.f32 %v2177, %v2184
      %v2201 = vadd.f32 %v2178, %v2184
      %v2202 = vmax.f32 %v2186, 0.0
      %v2203 = vmax.f32 %v2187, 0.0
      %v2204 = vmax.f32 %v2188, 0.0
      %v2205 = vmax.f32 %v2189, 0.0
      %v2206 = vmax.f32 %v2190, 0.0
      %v2207 = vmax.f32 %v2191, 0.0
      %v2208 = vmax.f32 %v2192, 0.0
      %v2209 = vmax.f32 %v2193, 0.0
      %v2210 = vmax.f32 %v2194, 0.0
      %v2211 = vmax.f32 %v2195, 0.0
      %v2212 = vmax.f32 %v2196, 0.0
      %v2213 = vmax.f32 %v2197, 0.0
      %v2214 = vmax.f32 %v2198, 0.0
      %v2215 = vmax.f32 %v2199, 0.0
      %v2216 = vmax.f32 %v2200, 0.0
      %v2217 = vmax.f32 %v2201, 0.0
      %v2218 = vld [vmem:[%s5] sm:$0xff]
      %v2219 = vld [vmem:[%s5 + $0x8] sm:$0xff]
      %v2220 = vld [vmem:[%s5 + $0x10] sm:$0xff]
      %v2221 = vld [vmem:[%s6] sm:$0x1]
      %v2223 = vlaneseq
      %v2224 = vshrl.u32 %v2223, 7
      %v2225 = vsub.s32 0, %v2224
      %v2226 = vrot.slane %v2221, %v2225
      %v2229 = vsel %vm1174, %v2202, 0
      %v2232 = vsel %vm1174, %v2203, 0
      %v2235 = vsel %vm1174, %v2204, 0
      %v2238 = vsel %vm1174, %v2205, 0
      %v2241 = vsel %vm1174, %v2206, 0
      %v2244 = vsel %vm1174, %v2207, 0
      %v2247 = vsel %vm1174, %v2208, 0
      %v2250 = vsel %vm1174, %v2209, 0
      %v2253 = vsel %vm1174, %v2210, 0
      %v2256 = vsel %vm1174, %v2211, 0
      %v2259 = vsel %vm1174, %v2212, 0
      %v2262 = vsel %vm1174, %v2213, 0
      %v2265 = vsel %vm1174, %v2214, 0
      %v2268 = vsel %vm1174, %v2215, 0
      %v2271 = vsel %vm1174, %v2216, 0
      %v2274 = vsel %vm1174, %v2217, 0
      %2276 = vmatprep.subr.mxu0 0.0
      %2277 = vmatpush1.msra.mxu0 %v2218
      %2278 = vmatprep.subr.mxu0 0.0
      %2279 = vmatpush1.msra.mxu0 %v2219
      %2280 = vmatprep.subr.mxu0 0.0
      %2281 = vmatpush1.msra.mxu0 %v2220
      %2282 = vmatprep.subr.mxu0 0.0
      %2283 = vmatpush1.msra.mxu0 0.0
      %2284 = vmatprep.subr.mxu0 0.0
      %2285 = vmatpush1.msra.mxu0 0.0
      %2286 = vmatprep.subr.mxu0 0.0
      %2287 = vmatpush1.msra.mxu0 0.0
      %2288 = vmatprep.subr.mxu0 0.0
      %2289 = vmatpush1.msra.mxu0 0.0
      %2290 = vmatprep.subr.mxu0 0.0
      %2291 = vmatpush1.msra.mxu0 0.0
      %2292 = vmatprep.subr.mxu0 0.0
      %2293 = vmatpush1.msra.mxu0 0.0
      %2294 = vmatprep.subr.mxu0 0.0
      %2295 = vmatpush1.msra.mxu0 0.0
      %2296 = vmatprep.subr.mxu0 0.0
      %2297 = vmatpush1.msra.mxu0 0.0
      %2298 = vmatprep.subr.mxu0 0.0
      %2299 = vmatpush1.msra.mxu0 0.0
      %2300 = vmatprep.subr.mxu0 0.0
      %2301 = vmatpush1.msra.mxu0 0.0
      %2302 = vmatprep.subr.mxu0 0.0
      %2303 = vmatpush1.msra.mxu0 0.0
      %2304 = vmatprep.subr.mxu0 0.0
      %2305 = vmatpush1.msra.mxu0 0.0
      %2306 = vmatprep.subr.mxu0 0.0
      %2307 = vmatpush1.msra.mxu0 0.0
      %2308 = vmatprep.subr.mxu0 0.0
      %2309 = vmatpush1.msra.mxu0 0.0
      %2310 = vmatprep.subr.mxu0 0.0
      %2311 = vmatpush1.msra.mxu0 0.0
      %2312 = vmatprep.subr.mxu0 0.0
      %2313 = vmatpush1.msra.mxu0 0.0
      %2314 = vmatprep.subr.mxu0 0.0
      %2315 = vmatpush1.msra.mxu0 0.0
      %2316 = vmatprep.subr.mxu0 0.0
      %2317 = vmatpush1.msra.mxu0 0.0
      %2318 = vmatprep.subr.mxu0 0.0
      %2319 = vmatpush1.msra.mxu0 0.0
      %2320 = vmatprep.subr.mxu0 0.0
      %2321 = vmatpush1.msra.mxu0 0.0
      %2322 = vmatprep.subr.mxu0 0.0
      %2323 = vmatpush1.msra.mxu0 0.0
      %2324 = vmatprep.subr.mxu0 0.0
      %2325 = vmatpush1.msra.mxu0 0.0
      %2326 = vmatprep.subr.mxu0 0.0
      %2327 = vmatpush1.msra.mxu0 0.0
      %2328 = vmatprep.subr.mxu0 0.0
      %2329 = vmatpush1.msra.mxu0 0.0
      %2330 = vmatprep.subr.mxu0 0.0
      %2331 = vmatpush1.msra.mxu0 0.0
      %2332 = vmatprep.subr.mxu0 0.0
      %2333 = vmatpush1.msra.mxu0 0.0
      %2334 = vmatprep.subr.mxu0 0.0
      %2335 = vmatpush1.msra.mxu0 0.0
      %2336 = vmatprep.subr.mxu0 0.0
      %2337 = vmatpush1.msra.mxu0 0.0
      %2338 = vmatprep.subr.mxu0 0.0
      %2339 = vmatpush1.msra.mxu0 0.0
      %2340 = vmatprep.mubr.f32.mxu0 0.0
      %2341 = vmatmul.mubr.f32.gmra.mrb[0].mxu0 %v2229
      %v2342 = vpop.f32.mrb[0].mxu0
      %v2343 = vadd.f32 %v2226, %v2342
      %v2344 = vpop.f32.mrb[0].mxu0
      %2345 = vmatprep.mubr.f32.mxu0 0.0
      %2346 = vmatmul.mubr.f32.gmra.mrb[0].mxu0 %v2232
      %v2347 = vpop.f32.mrb[0].mxu0
      %v2348 = vadd.f32 %v2226, %v2347
      %v2349 = vpop.f32.mrb[0].mxu0
      %2350 = vmatprep.mubr.f32.mxu0 0.0
      %2351 = vmatmul.mubr.f32.gmra.mrb[0].mxu0 %v2235
      %v2352 = vpop.f32.mrb[0].mxu0
      %v2353 = vadd.f32 %v2226, %v2352
      %v2354 = vpop.f32.mrb[0].mxu0
      %2355 = vmatprep.mubr.f32.mxu0 0.0
      %2356 = vmatmul.mubr.f32.gmra.mrb[0].mxu0 %v2238
      %v2357 = vpop.f32.mrb[0].mxu0
      %v2358 = vadd.f32 %v2226, %v2357
      %v2359 = vpop.f32.mrb[0].mxu0
      %2360 = vmatprep.mubr.f32.mxu0 0.0
      %2361 = vmatmul.mubr.f32.gmra.mrb[0].mxu0 %v2241
      %v2362 = vpop.f32.mrb[0].mxu0
      %v2363 = vadd.f32 %v2226, %v2362
      %v2364 = vpop.f32.mrb[0].mxu0
      %2365 = vmatprep.mubr.f32.mxu0 0.0
      %2366 = vmatmul.mubr.f32.gmra.mrb[0].mxu0 %v2244
      %v2367 = vpop.f32.mrb[0].mxu0
      %v2368 = vadd.f32 %v2226, %v2367
      %v2369 = vpop.f32.mrb[0].mxu0
      %2370 = vmatprep.mubr.f32.mxu0 0.0
      %2371 = vmatmul.mubr.f32.gmra.mrb[0].mxu0 %v2247
      %v2372 = vpop.f32.mrb[0].mxu0
      %v2373 = vadd.f32 %v2226, %v2372
      %v2374 = vpop.f32.mrb[0].mxu0
      %2375 = vmatprep.mubr.f32.mxu0 0.0
      %2376 = vmatmul.mubr.f32.gmra.mrb[0].mxu0 %v2250
      %v2377 = vpop.f32.mrb[0].mxu0
      %v2378 = vadd.f32 %v2226, %v2377
      %v2379 = vpop.f32.mrb[0].mxu0
      %2380 = vmatprep.mubr.f32.mxu0 0.0
      %2381 = vmatmul.mubr.f32.gmra.mrb[0].mxu0 %v2253
      %v2382 = vpop.f32.mrb[0].mxu0
      %v2383 = vadd.f32 %v2226, %v2382
      %v2384 = vpop.f32.mrb[0].mxu0
      %2385 = vmatprep.mubr.f32.mxu0 0.0
      %2386 = vmatmul.mubr.f32.gmra.mrb[0].mxu0 %v2256
      %v2387 = vpop.f32.mrb[0].mxu0
      %v2388 = vadd.f32 %v2226, %v2387
      %v2389 = vpop.f32.mrb[0].mxu0
      %2390 = vmatprep.mubr.f32.mxu0 0.0
      %2391 = vmatmul.mubr.f32.gmra.mrb[0].mxu0 %v2259
      %v2392 = vpop.f32.mrb[0].mxu0
      %v2393 = vadd.f32 %v2226, %v2392
      %v2394 = vpop.f32.mrb[0].mxu0
      %2395 = vmatprep.mubr.f32.mxu0 0.0
      %2396 = vmatmul.mubr.f32.gmra.mrb[0].mxu0 %v2262
      %v2397 = vpop.f32.mrb[0].mxu0
      %v2398 = vadd.f32 %v2226, %v2397
      %v2399 = vpop.f32.mrb[0].mxu0
      %2400 = vmatprep.mubr.f32.mxu0 0.0
      %2401 = vmatmul.mubr.f32.gmra.mrb[0].mxu0 %v2265
      %v2402 = vpop.f32.mrb[0].mxu0
      %v2403 = vadd.f32 %v2226, %v2402
      %v2404 = vpop.f32.mrb[0].mxu0
      %2405 = vmatprep.mubr.f32.mxu0 0.0
      %2406 = vmatmul.mubr.f32.gmra.mrb[0].mxu0 %v2268
      %v2407 = vpop.f32.mrb[0].mxu0
      %v2408 = vadd.f32 %v2226, %v2407
      %v2409 = vpop.f32.mrb[0].mxu0
      %2410 = vmatprep.mubr.f32.mxu0 0.0
      %2411 = vmatmul.mubr.f32.gmra.mrb[0].mxu0 %v2271
      %v2412 = vpop.f32.mrb[0].mxu0
      %v2413 = vadd.f32 %v2226, %v2412
      %v2414 = vpop.f32.mrb[0].mxu0
      %2415 = vmatprep.mubr.f32.mxu0 0.0
      %2416 = vmatmul.mubr.f32.gmra.mrb[0].mxu0 %v2274
      %v2417 = vpop.f32.mrb[0].mxu0
      %v2418 = vadd.f32 %v2226, %v2417
      %v2419 = vpop.f32.mrb[0].mxu0
      %2420 = vdwg.mxu0
      %v2421 = vrot.slane %v310, 1
      %v2422 = vrot.slane %v311, 1
      %v2423 = vsel %vm1406, %v2421, %v2422
      %v2424 = vrot.slane %v312, 1
      %v2425 = vsel %vm1406, %v2422, %v2424
      %v2426 = vrot.slane %v313, 1
      %v2427 = vrot.slane %v314, 1
      %v2428 = vsel %vm1406, %v2426, %v2427
      %v2429 = vrot.slane %v315, 1
      %v2430 = vsel %vm1406, %v2427, %v2429
      %v2431 = vrot.slane %v316, 1
      %v2432 = vrot.slane %v317, 1
      %v2433 = vsel %vm1406, %v2431, %v2432
      %v2434 = vrot.slane %v318, 1
      %v2435 = vsel %vm1406, %v2432, %v2434
      %v2436 = vrot.slane %v319, 1
      %v2437 = vrot.slane %v320, 1
      %v2438 = vsel %vm1406, %v2436, %v2437
      %v2439 = vrot.slane %v321, 1
      %v2440 = vsel %vm1406, %v2437, %v2439
      %v2441 = vrot.slane %v322, 1
      %v2442 = vrot.slane %v323, 1
      %v2443 = vsel %vm1406, %v2441, %v2442
      %v2444 = vrot.slane %v324, 1
      %v2445 = vsel %vm1406, %v2442, %v2444
      %v2446 = vrot.slane %v325, 1
      %v2447 = vrot.slane %v326, 1
      %v2448 = vsel %vm1406, %v2446, %v2447
      %v2449 = vrot.slane %v327, 1
      %v2450 = vsel %vm1406, %v2447, %v2449
      %v2451 = vrot.slane %v328, 1
      %v2452 = vrot.slane %v329, 1
      %v2453 = vsel %vm1406, %v2451, %v2452
      %v2454 = vrot.slane %v330, 1
      %v2455 = vsel %vm1406, %v2452, %v2454
      %v2456 = vrot.slane %v331, 1
      %v2457 = vrot.slane %v332, 1
      %v2458 = vsel %vm1406, %v2456, %v2457
      %v2459 = vrot.slane %v333, 1
      %v2460 = vsel %vm1406, %v2457, %v2459
      %v2477 = vadd.f32 %v2343, %v2423
      %v2478 = vadd.f32 %v2348, %v2425
      %v2479 = vadd.f32 %v2353, %v2428
      %v2480 = vadd.f32 %v2358, %v2430
      %v2481 = vadd.f32 %v2363, %v2433
      %v2482 = vadd.f32 %v2368, %v2435
      %v2483 = vadd.f32 %v2373, %v2438
      %v2484 = vadd.f32 %v2378, %v2440
      %v2485 = vadd.f32 %v2383, %v2443
      %v2486 = vadd.f32 %v2388, %v2445
      %v2487 = vadd.f32 %v2393, %v2448
      %v2488 = vadd.f32 %v2398, %v2450
      %v2489 = vadd.f32 %v2403, %v2453
      %v2490 = vadd.f32 %v2408, %v2455
      %v2491 = vadd.f32 %v2413, %v2458
      %v2492 = vadd.f32 %v2418, %v2460
      %vm2493 = vcmask 31744
      %2494 = vst.msk [vmem:[%s302] sm:$0xff] %vm2493, %v2477
      %2495 = vst.msk [vmem:[%s302 + $0x8] sm:$0xff] %vm2493, %v2478
      %2496 = vst.msk [vmem:[%s302 + $0x10] sm:$0xff] %vm2493, %v2479
      %2497 = vst.msk [vmem:[%s302 + $0x18] sm:$0xff] %vm2493, %v2480
      %2498 = vst.msk [vmem:[%s302 + $0x20] sm:$0xff] %vm2493, %v2481
      %2499 = vst.msk [vmem:[%s302 + $0x28] sm:$0xff] %vm2493, %v2482
      %2500 = vst.msk [vmem:[%s302 + $0x30] sm:$0xff] %vm2493, %v2483
      %2501 = vst.msk [vmem:[%s302 + $0x38] sm:$0xff] %vm2493, %v2484
      %2502 = vst.msk [vmem:[%s302 + $0x40] sm:$0xff] %vm2493, %v2485
      %2503 = vst.msk [vmem:[%s302 + $0x48] sm:$0xff] %vm2493, %v2486
      %2504 = vst.msk [vmem:[%s302 + $0x50] sm:$0xff] %vm2493, %v2487
      %2505 = vst.msk [vmem:[%s302 + $0x58] sm:$0xff] %vm2493, %v2488
      %2506 = vst.msk [vmem:[%s302 + $0x60] sm:$0xff] %vm2493, %v2489
      %2507 = vst.msk [vmem:[%s302 + $0x68] sm:$0xff] %vm2493, %v2490
      %2508 = vst.msk [vmem:[%s302 + $0x70] sm:$0xff] %vm2493, %v2491
      %2509 = vst.msk [vmem:[%s302 + $0x78] sm:$0xff] %vm2493, %v2492
      %s2510 = smul.u32 8, %s23
      %p2511 = scmp.lt.s32.totalorder %s22, 1
      %s2512 = scalar_select %p2511, %s22, 1
      %p2513 = scmp.lt.s32.totalorder %s2510, 15
      %s2514 = scalar_select %p2513, %s2510, 15
      %s2515 = smul.addr %s2514, 2
      %s2516 = smul.addr %s2512, 32
      %s2517 = sadd.s32 %s2515, %s2516
      %s2518 = smul.addr %s2517, 8
      %s2519 = scalar_lea.vmem %s7, %s2518
      // Predicated region
      $region57: #{tpu_custom_call.1} parent=47 // pred_check
        %p2520 = pneg %p202
      $region58: #{tpu_custom_call.1} parent=47 // pred_check_branch
        %2522 = sbr.rel (%p2520) target = $region60
      $region59: #{tpu_custom_call.1} parent=47 // pred_region
        %s2523 = smul.u32 8, %s23
      $region60: #{tpu_custom_call.1} parent=47 // pred_fallthru
        _
    $region48: #{tpu_custom_call.1} parent=5 // pred_fallthru
      _
    %p2524 = scmp.le.s32.totalorder 2, %s13
    // Predicated region
    $region61: #{tpu_custom_call.1} parent=5 // pred_check
      %p2525 = pneg %p2524
    $region62: #{tpu_custom_call.1} parent=5 // pred_check_branch
      %2527 = sbr.rel (%p2525) target = $region64
    $region63: #{tpu_custom_call.1} parent=5 // pred_region
      %s2528 = ssub.s32 %s13, 2
      // Predicated region
      $region65: #{tpu_custom_call.1} parent=63 // pred_check
        %p2529 = pneg %p208
      $region66: #{tpu_custom_call.1} parent=63 // pred_check_branch
        %2531 = sbr.rel (%p2529) target = $region68
      $region67: #{tpu_custom_call.1} parent=63 // pred_region
        %s2532 = smul.u32 8, %s25
        %p2533 = scmp.lt.s32.totalorder %s24, 1
        %s2534 = scalar_select %p2533, %s24, 1
        %p2535 = scmp.lt.s32.totalorder %s2532, 15
        %s2536 = scalar_select %p2535, %s2532, 15
        %s2537 = smul.addr %s2536, 2
        %s2538 = smul.addr %s2534, 32
        %s2539 = sadd.s32 %s2537, %s2538
        %s2540 = smul.addr %s2539, 8
        %s2541 = scalar_lea.vmem %s7, %s2540
      $region68: #{tpu_custom_call.1} parent=63 // pred_fallthru
        _
    $region64: #{tpu_custom_call.1} parent=5 // pred_fallthru
      _
  $region6: #{tpu_custom_call.1} parent=0 // loop_footer
    %s17 = sadd.s32 1, %s13
  $region7: #{tpu_custom_call.1} parent=0 // loop_footer_branch
    %12 = sbr.rel target = $region3
  $region8: #{tpu_custom_call.1} parent=0 // loop_exit
    _

</llo_original>
